<compile_context>
chip_gen: v5e
topology: v5e:2x2
jax: 0.10.0
libtpu: 0.0.40
codegen_flags: <defaults>
</compile_context>

<pallas_src>
import functools
import math

import jax
import jax.numpy as jnp
from jax import lax
from jax.experimental import pallas as pl
from jax.experimental.pallas import tpu as pltpu


# ----------------------------------------------------------------------------
# Fused encoder-stack kernel.  Grid = (batch_block, layer).
# ----------------------------------------------------------------------------
def _layernorm(z, g, b, eps):
    mu = jnp.mean(z, axis=-1, keepdims=True)
    var = jnp.mean((z - mu) ** 2, axis=-1, keepdims=True)
    return (z - mu) * lax.rsqrt(var + eps) * g + b


def encoder_stack_kernel(
    x_ref, mask_ref,
    wqkv_ref, bqkv_ref, wo_ref, w1_ref, b1_ref, w2_ref, vec_ref,
    out_ref,
    qkv_scr, ctx_scr,
    *, n_heads, head_dim, eps=1e-5,
):
    l = pl.program_id(1)

    # Initialize the carried activation (lives in the layer-invariant out block).
    @pl.when(l == 0)
    def _():
        out_ref[...] = x_ref[...]

    Bt, S, H = out_ref.shape
    M = Bt * S

    x3 = out_ref[...]                                # (Bt, S, H) f32, carried over layers
    x2 = x3.reshape(M, H)                            # 2-D slab for wide matmuls
    x_bf = x2.astype(jnp.bfloat16)

    # Packed per-layer vectors: rows = [bo, ln1_g, ln1_b, b2, ln2_g, ln2_b, 0, 0]
    vecs = vec_ref[0]                                # (8, H) f32
    bo = vecs[0:1, :]
    ln1_g = vecs[1:2, :]
    ln1_b = vecs[2:3, :]
    b2 = vecs[3:4, :]
    ln2_g = vecs[4:5, :]
    ln2_b = vecs[5:6, :]

    # --- fused QKV projection (wide MXU matmul; 1/sqrt(hd) folded into wq/bq) ---
    qkv = jnp.dot(x_bf, wqkv_ref[0], preferred_element_type=jnp.float32) + bqkv_ref[0]
    qkv_scr[...] = qkv.astype(jnp.bfloat16)          # (M, 3H) bf16 slab in VMEM

    # Additive mask: 0.0 keep / -1e10 masked, hoisted out of the head loop.
    neg_mask = (mask_ref[...] - 1.0) * jnp.float32(1e10)      # (Bt, 1, S)

    # --- per-head scores / softmax / PV; context assembled head-major in scratch ---
    for h in range(n_heads):     # per-head temporaries die at the ctx_scr store
        off = h * head_dim
        q = qkv_scr[:, off:off + head_dim].reshape(Bt, S, head_dim)          # bf16
        k = qkv_scr[:, H + off:H + off + head_dim].reshape(Bt, S, head_dim)  # bf16
        v = qkv_scr[:, 2 * H + off:2 * H + off + head_dim].reshape(Bt, S, head_dim)

        e = jnp.einsum("bqd,bkd->bqk", q, k,
                       preferred_element_type=jnp.float32)                   # (Bt, S, S)
        e = e + neg_mask
        e = e - jnp.max(e, axis=-1, keepdims=True)
        p = jnp.exp(e)
        attn = (p * pl.reciprocal(jnp.sum(p, axis=-1, keepdims=True),
                                  approx=True)).astype(jnp.bfloat16)
        ctx = jnp.einsum("bqk,bkd->bqd", attn, v,
                         preferred_element_type=jnp.float32)                 # (Bt, S, hd)
        ctx_scr[:, off:off + head_dim] = ctx.reshape(M, head_dim).astype(jnp.bfloat16)

    # --- fused output projection over the full (M, H) context slab ---
    attn_out = jnp.dot(ctx_scr[...], wo_ref[0],
                       preferred_element_type=jnp.float32) + bo              # (M, H)
    # dropout is identity (eval mode)
    res1 = _layernorm(x2 + attn_out, ln1_g, ln1_b, eps)

    # --- position-wise feed forward -----------------------------------------
    h1 = jnp.maximum(
        jnp.dot(res1.astype(jnp.bfloat16), w1_ref[0],
                preferred_element_type=jnp.float32) + b1_ref[0], 0.0
    ).astype(jnp.bfloat16)                                                   # (M, P) bf16
    h2 = jnp.dot(h1, w2_ref[0], preferred_element_type=jnp.float32) + b2     # (M, H)

    out = _layernorm(res1 + h2, ln2_g, ln2_b, eps)
    out_ref[...] = out.reshape(Bt, S, H)


# ----------------------------------------------------------------------------
# Parameter packing: per-layer params stacked into (L, ...) arrays, QKV fused,
# 1/sqrt(head_dim) folded into wq/bq, bf16 matmul weights, biases/LN packed.
# ----------------------------------------------------------------------------
def pack_encoder_layers(layers, n_heads):
    H = layers[0]["wq"].shape[0]
    hd = H // n_heads
    inv_scale = jnp.float32(1.0 / math.sqrt(hd))

    wqkv, bqkv, wo, w1, b1, w2, vecs = [], [], [], [], [], [], []
    for lp in layers:
        wqkv.append(jnp.concatenate(
            [lp["wq"] * inv_scale, lp["wk"], lp["wv"]], axis=1))   # (H, 3H)
        bqkv.append(jnp.concatenate(
            [lp["bq"] * inv_scale, lp["bk"], lp["bv"]], axis=1))   # (1, 3H)
        wo.append(lp["wo"])
        w1.append(lp["w1"])
        b1.append(lp["b1"])
        w2.append(lp["w2"])
        vecs.append(jnp.concatenate(
            [lp["bo"], lp["ln1_g"], lp["ln1_b"],
             lp["b2"], lp["ln2_g"], lp["ln2_b"],
             jnp.zeros((2, H), jnp.float32)], axis=0))             # (8, H)

    def stack(xs, dt):
        return jnp.stack(xs, axis=0).astype(dt)

    return {
        "wqkv": stack(wqkv, jnp.bfloat16),   # (L, H, 3H)
        "bqkv": stack(bqkv, jnp.float32),    # (L, 1, 3H)
        "wo":   stack(wo, jnp.bfloat16),     # (L, H, H)
        "w1":   stack(w1, jnp.bfloat16),     # (L, H, P)
        "b1":   stack(b1, jnp.float32),      # (L, 1, P)
        "w2":   stack(w2, jnp.bfloat16),     # (L, P, H)
        "vecs": stack(vecs, jnp.float32),    # (L, 8, H)
    }


def encoder_stack_pallas(x, mask, packed, n_heads, batch_block=None):
    """x: (B, S, H) f32, mask: (B, 1, S) f32, packed: stacked layer params."""
    B, S, H = x.shape
    L = packed["wqkv"].shape[0]
    P = packed["w1"].shape[2]
    hd = H // n_heads

    # Whole batch per block by default: weights are DMA'd once per batch block.
    # TODO(synk): on v7x (2 TCs) with large B, use Bt = B//2 so the parallel batch
    # axis feeds both cores.
    Bt = batch_block or B
    assert B % Bt == 0, "batch must be divisible by batch_block"
    nb = B // Bt
    M = Bt * S

    def wspec(shape):
        nd = len(shape)
        return pl.BlockSpec((1,) + tuple(shape[1:]),
                            lambda b, l, _nd=nd: (l,) + (0,) * (_nd - 1))

    in_specs = [
        pl.BlockSpec((Bt, S, H), lambda b, l: (b, 0, 0)),   # x (read only at l==0)
        pl.BlockSpec((Bt, 1, S), lambda b, l: (b, 0, 0)),   # mask
        wspec(packed["wqkv"].shape), wspec(packed["bqkv"].shape),
        wspec(packed["wo"].shape),
        wspec(packed["w1"].shape), wspec(packed["b1"].shape),
        wspec(packed["w2"].shape),
        wspec(packed["vecs"].shape),
    ]

    # VMEM budget estimate (weights double-buffered across layer steps so layer
    # l+1 DMA overlaps layer l compute).
    weight_db = 2 * ((4 * H * H + 2 * H * P) * 2 + (11 * H + P) * 4)   # bf16 mats + packed vecs
    act = 2 * (2 * Bt * S * H + Bt * S) * 4                            # x / out blocks + mask
    scr = M * 3 * H * 2 + M * H * 2                                    # qkv + ctx bf16 scratch
    temps = M * 3 * H * 4 + 2 * Bt * S * S * 4 + M * P * 4 + 4 * M * H * 4
    est = weight_db + act + scr + temps

    try:  # generation-aware cap (~46 MiB on v7x, ~92 MiB on v5e/v6e)
        vmem_cap = pltpu.get_tpu_info().vmem_capacity_bytes
    except Exception:
        vmem_cap = 64 * 2**20
    vmem_limit = int(min(max(int(1.5 * est), 32 * 2**20), int(0.72 * vmem_cap)))

    kernel = functools.partial(encoder_stack_kernel, n_heads=n_heads, head_dim=hd)

    # NOTE: the layer axis must stay innermost and "arbitrary": the activation is
    # carried across layer steps in the layer-invariant output VMEM block.
    return pl.pallas_call(
        kernel,
        out_shape=jax.ShapeDtypeStruct((B, S, H), jnp.float32),
        grid=(nb, L),
        in_specs=in_specs,
        out_specs=pl.BlockSpec((Bt, S, H), lambda b, l: (b, 0, 0)),
        scratch_shapes=[
            pltpu.VMEM((M, 3 * H), jnp.bfloat16),   # fused QKV slab
            pltpu.VMEM((M, H), jnp.bfloat16),       # per-head context slab
        ],
        compiler_params=pltpu.CompilerParams(
            dimension_semantics=("parallel", "arbitrary"),
            vmem_limit_bytes=vmem_limit),
    )(
        x, mask,
        packed["wqkv"], packed["bqkv"], packed["wo"],
        packed["w1"], packed["b1"], packed["w2"], packed["vecs"],
    )


# ----------------------------------------------------------------------------
# Full Encoder forward: embedding (glue, plain JAX gather) + fused layer stack.
# ----------------------------------------------------------------------------
def encoder_forward(src_ids, src_mask, params, n_heads):
    # TODO(synk): token/position embedding gather left to XLA (tiny, no Pallas win).
    tok_emb = params["tok_embedding"]   # (vocab, H)
    pos_emb = params["pos_embedding"]   # (max_len, H)
    H = tok_emb.shape[1]
    B, S = src_ids.shape

    pos = jnp.arange(S, dtype=jnp.int32)
    x = (tok_emb[src_ids] * jnp.sqrt(jnp.float32(H))
         + pos_emb[pos][None, :, :]).astype(jnp.float32)
    # dropout on embeddings is identity (eval mode)

    packed = pack_encoder_layers(params["layers"], n_heads)
    return encoder_stack_pallas(x, src_mask, packed, n_heads)


# ----------------------------------------------------------------------------
# Pure-JAX f32 reference (same math) for a correctness check.
# ----------------------------------------------------------------------------
def _ref_layer(x, mask, p, n_heads):
    B, S, H = x.shape
    hd = H // n_heads

    def ln(z, g, b, eps=1e-5):
        mu = z.mean(-1, keepdims=True)
        var = ((z - mu) ** 2).mean(-1, keepdims=True)
        return (z - mu) / jnp.sqrt(var + eps) * g + b

    q = x @ p["wq"] + p["bq"]
    k = x @ p["wk"] + p["bk"]
    v = x @ p["wv"] + p["bv"]
    q = q.reshape(B, S, n_heads, hd).transpose(0, 2, 1, 3)
    k = k.reshape(B, S, n_heads, hd).transpose(0, 2, 1, 3)
    v = v.reshape(B, S, n_heads, hd).transpose(0, 2, 1, 3)
    e = jnp.einsum("bhqd,bhkd->bhqk", q, k) / jnp.sqrt(jnp.float32(hd))
    e = jnp.where(mask[:, None, :, :] == 0.0, -1e10, e)
    a = jax.nn.softmax(e, axis=-1)
    ctx = jnp.einsum("bhqk,bhkd->bhqd", a, v).transpose(0, 2, 1, 3).reshape(B, S, H)
    attn_out = ctx @ p["wo"] + p["bo"]
    r1 = ln(x + attn_out, p["ln1_g"], p["ln1_b"])
    h = jnp.maximum(r1 @ p["w1"] + p["b1"], 0.0) @ p["w2"] + p["b2"]
    return ln(r1 + h, p["ln2_g"], p["ln2_b"])


def _ref_encoder(src_ids, src_mask, params, n_heads):
    H = params["tok_embedding"].shape[1]
    S = src_ids.shape[1]
    x = (params["tok_embedding"][src_ids] * jnp.sqrt(jnp.float32(H))
         + params["pos_embedding"][jnp.arange(S)][None])
    for lp in params["layers"]:
        x = _ref_layer(x, src_mask, lp, n_heads)
    return x


# ----------------------------------------------------------------------------
# Deterministic synthetic parameter init.
# ----------------------------------------------------------------------------
def init_params(key, vocab, hidden, pf_dim, n_layers, max_len):
    def dense(k, shape, scale=0.05):
        return (scale * jax.random.normal(k, shape)).astype(jnp.float32)

    keys = jax.random.split(key, 2 + n_layers)
    params = {
        "tok_embedding": dense(keys[0], (vocab, hidden)),
        "pos_embedding": dense(keys[1], (max_len, hidden)),
        "layers": [],
    }
    for li in range(n_layers):
        lk = jax.random.split(keys[2 + li], 8)
        params["layers"].append({
            "wq": dense(lk[0], (hidden, hidden)), "bq": jnp.zeros((1, hidden), jnp.float32),
            "wk": dense(lk[1], (hidden, hidden)), "bk": jnp.zeros((1, hidden), jnp.float32),
            "wv": dense(lk[2], (hidden, hidden)), "bv": jnp.zeros((1, hidden), jnp.float32),
            "wo": dense(lk[3], (hidden, hidden)), "bo": jnp.zeros((1, hidden), jnp.float32),
            "ln1_g": jnp.ones((1, hidden), jnp.float32),
            "ln1_b": jnp.zeros((1, hidden), jnp.float32),
            "w1": dense(lk[4], (hidden, pf_dim)), "b1": jnp.zeros((1, pf_dim), jnp.float32),
            "w2": dense(lk[5], (pf_dim, hidden)), "b2": jnp.zeros((1, hidden), jnp.float32),
            "ln2_g": jnp.ones((1, hidden), jnp.float32),
            "ln2_b": jnp.zeros((1, hidden), jnp.float32),
        })
    return params


if __name__ == "__main__":
    # small shapes consistent with the module
    B, S = 2, 8
    VOCAB, HIDDEN, PF_DIM = 50, 32, 64
    N_LAYERS, N_HEADS = 2, 4
    MAX_LEN = 256

    key = jax.random.PRNGKey(0)
    k_par, k_ids = jax.random.split(key)
    params = init_params(k_par, VOCAB, HIDDEN, PF_DIM, N_LAYERS, MAX_LEN)

    src_ids = jax.random.randint(k_ids, (B, S), 0, VOCAB, dtype=jnp.int32)
    # mask: batch 0 fully visible, batch 1 masks the last two positions
    src_mask = jnp.ones((B, 1, S), jnp.float32)
    src_mask = src_mask.at[1, 0, -2:].set(0.0)

    out = encoder_forward(src_ids, src_mask, params, N_HEADS)
    out = jax.block_until_ready(out)

    ref = _ref_encoder(src_ids, src_mask, params, N_HEADS)
    assert out.shape == (B, S, HIDDEN)
    # bf16 MXU inputs + approx reciprocal -> slightly looser tolerance vs f32 reference
    assert jnp.allclose(out, ref, atol=3e-2, rtol=3e-2), "mismatch vs reference"

    print("KERNEL_OK")
</pallas_src>

<mosaic_0001>
module attributes {stable_mosaic.version = 11 : i64} {
  func.func @encoder_stack_kernel(%arg0: i32, %arg1: i32, %arg2: memref<2x8x32xf32, #tpu.memory_space<vmem>>, %arg3: memref<2x1x8xf32, #tpu.memory_space<vmem>>, %arg4: memref<1x32x96xbf16, #tpu.memory_space<vmem>>, %arg5: memref<1x1x96xf32, #tpu.memory_space<vmem>>, %arg6: memref<1x32x32xbf16, #tpu.memory_space<vmem>>, %arg7: memref<1x32x64xbf16, #tpu.memory_space<vmem>>, %arg8: memref<1x1x64xf32, #tpu.memory_space<vmem>>, %arg9: memref<1x64x32xbf16, #tpu.memory_space<vmem>>, %arg10: memref<1x8x32xf32, #tpu.memory_space<vmem>>, %arg11: memref<2x8x32xf32, #tpu.memory_space<vmem>>, %arg12: memref<16x96xbf16, #tpu.memory_space<vmem>>, %arg13: memref<16x32xbf16, #tpu.memory_space<vmem>>) attributes {dimension_semantics = [#tpu.dimension_semantics<parallel>, #tpu.dimension_semantics<arbitrary>], iteration_bounds = array<i64: 1, 2>, scalar_prefetch = 0 : i64, scratch_operands = 2 : i64, tpu.core_type = #tpu.core_type<tc>, window_params = [{transform_indices = @transform_0, window_bounds = array<i64: 2, 8, 32>}, {transform_indices = @transform_1, window_bounds = array<i64: 2, 1, 8>}, {transform_indices = @transform_2, window_bounds = array<i64: 1, 32, 96>}, {transform_indices = @transform_3, window_bounds = array<i64: 1, 1, 96>}, {transform_indices = @transform_4, window_bounds = array<i64: 1, 32, 32>}, {transform_indices = @transform_5, window_bounds = array<i64: 1, 32, 64>}, {transform_indices = @transform_6, window_bounds = array<i64: 1, 1, 64>}, {transform_indices = @transform_7, window_bounds = array<i64: 1, 64, 32>}, {transform_indices = @transform_8, window_bounds = array<i64: 1, 8, 32>}, {transform_indices = @transform_9, window_bounds = array<i64: 2, 8, 32>}]} {
    %c0_i32 = arith.constant 0 : i32
    %0 = arith.cmpi eq, %arg1, %c0_i32 : i32
    %1 = arith.extui %0 : i1 to i32
    %c0_i32_0 = arith.constant 0 : i32
    %2 = arith.cmpi ne, %1, %c0_i32_0 : i32
    scf.if %2 {
      %c0_87 = arith.constant 0 : index
      %c0_88 = arith.constant 0 : index
      %c0_89 = arith.constant 0 : index
      %194 = vector.load %arg2[%c0_87, %c0_88, %c0_89] : memref<2x8x32xf32, #tpu.memory_space<vmem>>, vector<2x8x32xf32>
      %c0_90 = arith.constant 0 : index
      %c0_91 = arith.constant 0 : index
      %c0_92 = arith.constant 0 : index
      %195 = vector.load %arg11[%c0_90, %c0_91, %c0_92] : memref<2x8x32xf32, #tpu.memory_space<vmem>>, vector<2x8x32xf32>
      tpu.vector_store %arg11[%c0_90, %c0_91, %c0_92], %194 {strides = array<i32>} : memref<2x8x32xf32, #tpu.memory_space<vmem>>, vector<2x8x32xf32>,
    } else {
    }
    %c0 = arith.constant 0 : index
    %c0_1 = arith.constant 0 : index
    %c0_2 = arith.constant 0 : index
    %3 = vector.load %arg11[%c0, %c0_1, %c0_2] : memref<2x8x32xf32, #tpu.memory_space<vmem>>, vector<2x8x32xf32>
    %4 = vector.shape_cast %3 : vector<2x8x32xf32> to vector<16x32xf32>
    %5 = arith.truncf %4 : vector<16x32xf32> to vector<16x32xbf16>
    %c0_3 = arith.constant 0 : index
    %c0_4 = arith.constant 0 : index
    %c0_5 = arith.constant 0 : index
    %6 = vector.load %arg10[%c0_3, %c0_4, %c0_5] : memref<1x8x32xf32, #tpu.memory_space<vmem>>, vector<1x8x32xf32>
    %7 = vector.shape_cast %6 : vector<1x8x32xf32> to vector<8x32xf32>
    %8 = vector.extract_strided_slice %7 {offsets = [0, 0], sizes = [1, 32], strides = [1, 1]} : vector<8x32xf32> to vector<1x32xf32>
    %9 = vector.extract_strided_slice %7 {offsets = [1, 0], sizes = [1, 32], strides = [1, 1]} : vector<8x32xf32> to vector<1x32xf32>
    %10 = vector.extract_strided_slice %7 {offsets = [2, 0], sizes = [1, 32], strides = [1, 1]} : vector<8x32xf32> to vector<1x32xf32>
    %11 = vector.extract_strided_slice %7 {offsets = [3, 0], sizes = [1, 32], strides = [1, 1]} : vector<8x32xf32> to vector<1x32xf32>
    %12 = vector.extract_strided_slice %7 {offsets = [4, 0], sizes = [1, 32], strides = [1, 1]} : vector<8x32xf32> to vector<1x32xf32>
    %13 = vector.extract_strided_slice %7 {offsets = [5, 0], sizes = [1, 32], strides = [1, 1]} : vector<8x32xf32> to vector<1x32xf32>
    %c0_6 = arith.constant 0 : index
    %c0_7 = arith.constant 0 : index
    %c0_8 = arith.constant 0 : index
    %14 = vector.load %arg4[%c0_6, %c0_7, %c0_8] : memref<1x32x96xbf16, #tpu.memory_space<vmem>>, vector<1x32x96xbf16>
    %15 = vector.shape_cast %14 : vector<1x32x96xbf16> to vector<32x96xbf16>
    %cst = arith.constant dense<0.000000e+00> : vector<16x96xf32>
    %16 = tpu.matmul %5, %15, %cst {dimension_numbers = #tpu.dot_dimension_numbers<[1], [0], [0], [1], [0, 0, 1, 1], [], []>} : vector<16x32xbf16>, vector<32x96xbf16>, vector<16x96xf32> -> vector<16x96xf32>
    %c0_9 = arith.constant 0 : index
    %c0_10 = arith.constant 0 : index
    %c0_11 = arith.constant 0 : index
    %17 = vector.load %arg5[%c0_9, %c0_10, %c0_11] : memref<1x1x96xf32, #tpu.memory_space<vmem>>, vector<1x1x96xf32>
    %18 = vector.shape_cast %17 : vector<1x1x96xf32> to vector<1x96xf32>
    %19 = vector.broadcast %18 : vector<1x96xf32> to vector<16x96xf32>
    %20 = arith.addf %16, %19 : vector<16x96xf32>
    %21 = arith.truncf %20 : vector<16x96xf32> to vector<16x96xbf16>
    %c0_12 = arith.constant 0 : index
    %c0_13 = arith.constant 0 : index
    %22 = vector.load %arg12[%c0_12, %c0_13] : memref<16x96xbf16, #tpu.memory_space<vmem>>, vector<16x96xbf16>
    tpu.vector_store %arg12[%c0_12, %c0_13], %21 {strides = array<i32>} : memref<16x96xbf16, #tpu.memory_space<vmem>>, vector<16x96xbf16>,
    %c0_14 = arith.constant 0 : index
    %c0_15 = arith.constant 0 : index
    %c0_16 = arith.constant 0 : index
    %23 = vector.load %arg3[%c0_14, %c0_15, %c0_16] : memref<2x1x8xf32, #tpu.memory_space<vmem>>, vector<2x1x8xf32>
    %cst_17 = arith.constant 1.000000e+00 : f32
    %24 = vector.broadcast %cst_17 : f32 to vector<2x1x8xf32>
    %25 = arith.subf %23, %24 : vector<2x1x8xf32>
    %cst_18 = arith.constant 1.000000e+10 : f32
    %26 = vector.broadcast %cst_18 : f32 to vector<2x1x8xf32>
    %27 = arith.mulf %25, %26 : vector<2x1x8xf32>
    %c0_19 = arith.constant 0 : index
    %c0_20 = arith.constant 0 : index
    %28 = vector.load %arg12[%c0_19, %c0_20] : memref<16x96xbf16, #tpu.memory_space<vmem>>, vector<16x8xbf16>
    %29 = vector.shape_cast %28 : vector<16x8xbf16> to vector<2x8x8xbf16>
    %c0_21 = arith.constant 0 : index
    %c32 = arith.constant 32 : index
    %30 = vector.load %arg12[%c0_21, %c32] : memref<16x96xbf16, #tpu.memory_space<vmem>>, vector<16x8xbf16>
    %31 = vector.shape_cast %30 : vector<16x8xbf16> to vector<2x8x8xbf16>
    %c0_22 = arith.constant 0 : index
    %c64 = arith.constant 64 : index
    %32 = vector.load %arg12[%c0_22, %c64] : memref<16x96xbf16, #tpu.memory_space<vmem>>, vector<16x8xbf16>
    %33 = vector.shape_cast %32 : vector<16x8xbf16> to vector<2x8x8xbf16>
    "tpu.trace_start"() <{level = 10 : i32, message = "bqd,bkd->bqk"}> : () -> ()
    %cst_23 = arith.constant dense<0.000000e+00> : vector<2x8x8xf32>
    %34 = tpu.matmul %29, %31, %cst_23 {dimension_numbers = #tpu.dot_dimension_numbers<[2], [2], [1], [1], [0, 0, 0, 1, 1, 1], [0], [0]>} : vector<2x8x8xbf16>, vector<2x8x8xbf16>, vector<2x8x8xf32> -> vector<2x8x8xf32>
    "tpu.trace_stop"() : () -> ()
    %35 = vector.broadcast %27 : vector<2x1x8xf32> to vector<2x8x8xf32>
    %36 = arith.addf %34, %35 : vector<2x8x8xf32>
    %cst_24 = arith.constant dense<0xFF800000> : vector<2x8xf32>
    %37 = vector.multi_reduction <maximumf>, %36, %cst_24 [2] : vector<2x8x8xf32> to vector<2x8xf32>
    %38 = vector.shape_cast %37 : vector<2x8xf32> to vector<2x8x1xf32>
    %39 = vector.broadcast %38 : vector<2x8x1xf32> to vector<2x8x8xf32>
    %40 = arith.subf %36, %39 : vector<2x8x8xf32>
    %41 = math.exp %40 : vector<2x8x8xf32>
    %cst_25 = arith.constant dense<0.000000e+00> : vector<2x8xf32>
    %42 = vector.multi_reduction <add>, %41, %cst_25 [2] : vector<2x8x8xf32> to vector<2x8xf32>
    %43 = vector.shape_cast %42 : vector<2x8xf32> to vector<2x8x1xf32>
    %44 = tpu.reciprocal %43 {approx = true} : vector<2x8x1xf32> -> vector<2x8x1xf32>
    %45 = vector.broadcast %44 : vector<2x8x1xf32> to vector<2x8x8xf32>
    %46 = arith.mulf %41, %45 : vector<2x8x8xf32>
    %47 = arith.truncf %46 : vector<2x8x8xf32> to vector<2x8x8xbf16>
    "tpu.trace_start"() <{level = 10 : i32, message = "bqk,bkd->bqd"}> : () -> ()
    %cst_26 = arith.constant dense<0.000000e+00> : vector<2x8x8xf32>
    %48 = tpu.matmul %47, %33, %cst_26 {dimension_numbers = #tpu.dot_dimension_numbers<[2], [1], [1], [2], [0, 0, 0, 1, 1, 2], [0], [0]>} : vector<2x8x8xbf16>, vector<2x8x8xbf16>, vector<2x8x8xf32> -> vector<2x8x8xf32>
    "tpu.trace_stop"() : () -> ()
    %49 = vector.shape_cast %48 : vector<2x8x8xf32> to vector<16x8xf32>
    %50 = arith.truncf %49 : vector<16x8xf32> to vector<16x8xbf16>
    %c0_27 = arith.constant 0 : index
    %c0_28 = arith.constant 0 : index
    %51 = vector.load %arg13[%c0_27, %c0_28] : memref<16x32xbf16, #tpu.memory_space<vmem>>, vector<16x8xbf16>
    tpu.vector_store %arg13[%c0_27, %c0_28], %50 {strides = array<i32>} : memref<16x32xbf16, #tpu.memory_space<vmem>>, vector<16x8xbf16>,
    %c0_29 = arith.constant 0 : index
    %c8 = arith.constant 8 : index
    %52 = vector.load %arg12[%c0_29, %c8] : memref<16x96xbf16, #tpu.memory_space<vmem>>, vector<16x8xbf16>
    %53 = vector.shape_cast %52 : vector<16x8xbf16> to vector<2x8x8xbf16>
    %c0_30 = arith.constant 0 : index
    %c40 = arith.constant 40 : index
    %54 = vector.load %arg12[%c0_30, %c40] : memref<16x96xbf16, #tpu.memory_space<vmem>>, vector<16x8xbf16>
    %55 = vector.shape_cast %54 : vector<16x8xbf16> to vector<2x8x8xbf16>
    %c0_31 = arith.constant 0 : index
    %c72 = arith.constant 72 : index
    %56 = vector.load %arg12[%c0_31, %c72] : memref<16x96xbf16, #tpu.memory_space<vmem>>, vector<16x8xbf16>
    %57 = vector.shape_cast %56 : vector<16x8xbf16> to vector<2x8x8xbf16>
    "tpu.trace_start"() <{level = 10 : i32, message = "bqd,bkd->bqk"}> : () -> ()
    %cst_32 = arith.constant dense<0.000000e+00> : vector<2x8x8xf32>
    %58 = tpu.matmul %53, %55, %cst_32 {dimension_numbers = #tpu.dot_dimension_numbers<[2], [2], [1], [1], [0, 0, 0, 1, 1, 1], [0], [0]>} : vector<2x8x8xbf16>, vector<2x8x8xbf16>, vector<2x8x8xf32> -> vector<2x8x8xf32>
    "tpu.trace_stop"() : () -> ()
    %59 = vector.broadcast %27 : vector<2x1x8xf32> to vector<2x8x8xf32>
    %60 = arith.addf %58, %59 : vector<2x8x8xf32>
    %cst_33 = arith.constant dense<0xFF800000> : vector<2x8xf32>
    %61 = vector.multi_reduction <maximumf>, %60, %cst_33 [2] : vector<2x8x8xf32> to vector<2x8xf32>
    %62 = vector.shape_cast %61 : vector<2x8xf32> to vector<2x8x1xf32>
    %63 = vector.broadcast %62 : vector<2x8x1xf32> to vector<2x8x8xf32>
    %64 = arith.subf %60, %63 : vector<2x8x8xf32>
    %65 = math.exp %64 : vector<2x8x8xf32>
    %cst_34 = arith.constant dense<0.000000e+00> : vector<2x8xf32>
    %66 = vector.multi_reduction <add>, %65, %cst_34 [2] : vector<2x8x8xf32> to vector<2x8xf32>
    %67 = vector.shape_cast %66 : vector<2x8xf32> to vector<2x8x1xf32>
    %68 = tpu.reciprocal %67 {approx = true} : vector<2x8x1xf32> -> vector<2x8x1xf32>
    %69 = vector.broadcast %68 : vector<2x8x1xf32> to vector<2x8x8xf32>
    %70 = arith.mulf %65, %69 : vector<2x8x8xf32>
    %71 = arith.truncf %70 : vector<2x8x8xf32> to vector<2x8x8xbf16>
    "tpu.trace_start"() <{level = 10 : i32, message = "bqk,bkd->bqd"}> : () -> ()
    %cst_35 = arith.constant dense<0.000000e+00> : vector<2x8x8xf32>
    %72 = tpu.matmul %71, %57, %cst_35 {dimension_numbers = #tpu.dot_dimension_numbers<[2], [1], [1], [2], [0, 0, 0, 1, 1, 2], [0], [0]>} : vector<2x8x8xbf16>, vector<2x8x8xbf16>, vector<2x8x8xf32> -> vector<2x8x8xf32>
    "tpu.trace_stop"() : () -> ()
    %73 = vector.shape_cast %72 : vector<2x8x8xf32> to vector<16x8xf32>
    %74 = arith.truncf %73 : vector<16x8xf32> to vector<16x8xbf16>
    %c0_36 = arith.constant 0 : index
    %c8_37 = arith.constant 8 : index
    %75 = vector.load %arg13[%c0_36, %c8_37] : memref<16x32xbf16, #tpu.memory_space<vmem>>, vector<16x8xbf16>
    tpu.vector_store %arg13[%c0_36, %c8_37], %74 {strides = array<i32>} : memref<16x32xbf16, #tpu.memory_space<vmem>>, vector<16x8xbf16>,
    %c0_38 = arith.constant 0 : index
    %c16 = arith.constant 16 : index
    %76 = vector.load %arg12[%c0_38, %c16] : memref<16x96xbf16, #tpu.memory_space<vmem>>, vector<16x8xbf16>
    %77 = vector.shape_cast %76 : vector<16x8xbf16> to vector<2x8x8xbf16>
    %c0_39 = arith.constant 0 : index
    %c48 = arith.constant 48 : index
    %78 = vector.load %arg12[%c0_39, %c48] : memref<16x96xbf16, #tpu.memory_space<vmem>>, vector<16x8xbf16>
    %79 = vector.shape_cast %78 : vector<16x8xbf16> to vector<2x8x8xbf16>
    %c0_40 = arith.constant 0 : index
    %c80 = arith.constant 80 : index
    %80 = vector.load %arg12[%c0_40, %c80] : memref<16x96xbf16, #tpu.memory_space<vmem>>, vector<16x8xbf16>
    %81 = vector.shape_cast %80 : vector<16x8xbf16> to vector<2x8x8xbf16>
    "tpu.trace_start"() <{level = 10 : i32, message = "bqd,bkd->bqk"}> : () -> ()
    %cst_41 = arith.constant dense<0.000000e+00> : vector<2x8x8xf32>
    %82 = tpu.matmul %77, %79, %cst_41 {dimension_numbers = #tpu.dot_dimension_numbers<[2], [2], [1], [1], [0, 0, 0, 1, 1, 1], [0], [0]>} : vector<2x8x8xbf16>, vector<2x8x8xbf16>, vector<2x8x8xf32> -> vector<2x8x8xf32>
    "tpu.trace_stop"() : () -> ()
    %83 = vector.broadcast %27 : vector<2x1x8xf32> to vector<2x8x8xf32>
    %84 = arith.addf %82, %83 : vector<2x8x8xf32>
    %cst_42 = arith.constant dense<0xFF800000> : vector<2x8xf32>
    %85 = vector.multi_reduction <maximumf>, %84, %cst_42 [2] : vector<2x8x8xf32> to vector<2x8xf32>
    %86 = vector.shape_cast %85 : vector<2x8xf32> to vector<2x8x1xf32>
    %87 = vector.broadcast %86 : vector<2x8x1xf32> to vector<2x8x8xf32>
    %88 = arith.subf %84, %87 : vector<2x8x8xf32>
    %89 = math.exp %88 : vector<2x8x8xf32>
    %cst_43 = arith.constant dense<0.000000e+00> : vector<2x8xf32>
    %90 = vector.multi_reduction <add>, %89, %cst_43 [2] : vector<2x8x8xf32> to vector<2x8xf32>
    %91 = vector.shape_cast %90 : vector<2x8xf32> to vector<2x8x1xf32>
    %92 = tpu.reciprocal %91 {approx = true} : vector<2x8x1xf32> -> vector<2x8x1xf32>
    %93 = vector.broadcast %92 : vector<2x8x1xf32> to vector<2x8x8xf32>
    %94 = arith.mulf %89, %93 : vector<2x8x8xf32>
    %95 = arith.truncf %94 : vector<2x8x8xf32> to vector<2x8x8xbf16>
    "tpu.trace_start"() <{level = 10 : i32, message = "bqk,bkd->bqd"}> : () -> ()
    %cst_44 = arith.constant dense<0.000000e+00> : vector<2x8x8xf32>
    %96 = tpu.matmul %95, %81, %cst_44 {dimension_numbers = #tpu.dot_dimension_numbers<[2], [1], [1], [2], [0, 0, 0, 1, 1, 2], [0], [0]>} : vector<2x8x8xbf16>, vector<2x8x8xbf16>, vector<2x8x8xf32> -> vector<2x8x8xf32>
    "tpu.trace_stop"() : () -> ()
    %97 = vector.shape_cast %96 : vector<2x8x8xf32> to vector<16x8xf32>
    %98 = arith.truncf %97 : vector<16x8xf32> to vector<16x8xbf16>
    %c0_45 = arith.constant 0 : index
    %c16_46 = arith.constant 16 : index
    %99 = vector.load %arg13[%c0_45, %c16_46] : memref<16x32xbf16, #tpu.memory_space<vmem>>, vector<16x8xbf16>
    tpu.vector_store %arg13[%c0_45, %c16_46], %98 {strides = array<i32>} : memref<16x32xbf16, #tpu.memory_space<vmem>>, vector<16x8xbf16>,
    %c0_47 = arith.constant 0 : index
    %c24 = arith.constant 24 : index
    %100 = vector.load %arg12[%c0_47, %c24] : memref<16x96xbf16, #tpu.memory_space<vmem>>, vector<16x8xbf16>
    %101 = vector.shape_cast %100 : vector<16x8xbf16> to vector<2x8x8xbf16>
    %c0_48 = arith.constant 0 : index
    %c56 = arith.constant 56 : index
    %102 = vector.load %arg12[%c0_48, %c56] : memref<16x96xbf16, #tpu.memory_space<vmem>>, vector<16x8xbf16>
    %103 = vector.shape_cast %102 : vector<16x8xbf16> to vector<2x8x8xbf16>
    %c0_49 = arith.constant 0 : index
    %c88 = arith.constant 88 : index
    %104 = vector.load %arg12[%c0_49, %c88] : memref<16x96xbf16, #tpu.memory_space<vmem>>, vector<16x8xbf16>
    %105 = vector.shape_cast %104 : vector<16x8xbf16> to vector<2x8x8xbf16>
    "tpu.trace_start"() <{level = 10 : i32, message = "bqd,bkd->bqk"}> : () -> ()
    %cst_50 = arith.constant dense<0.000000e+00> : vector<2x8x8xf32>
    %106 = tpu.matmul %101, %103, %cst_50 {dimension_numbers = #tpu.dot_dimension_numbers<[2], [2], [1], [1], [0, 0, 0, 1, 1, 1], [0], [0]>} : vector<2x8x8xbf16>, vector<2x8x8xbf16>, vector<2x8x8xf32> -> vector<2x8x8xf32>
    "tpu.trace_stop"() : () -> ()
    %107 = vector.broadcast %27 : vector<2x1x8xf32> to vector<2x8x8xf32>
    %108 = arith.addf %106, %107 : vector<2x8x8xf32>
    %cst_51 = arith.constant dense<0xFF800000> : vector<2x8xf32>
    %109 = vector.multi_reduction <maximumf>, %108, %cst_51 [2] : vector<2x8x8xf32> to vector<2x8xf32>
    %110 = vector.shape_cast %109 : vector<2x8xf32> to vector<2x8x1xf32>
    %111 = vector.broadcast %110 : vector<2x8x1xf32> to vector<2x8x8xf32>
    %112 = arith.subf %108, %111 : vector<2x8x8xf32>
    %113 = math.exp %112 : vector<2x8x8xf32>
    %cst_52 = arith.constant dense<0.000000e+00> : vector<2x8xf32>
    %114 = vector.multi_reduction <add>, %113, %cst_52 [2] : vector<2x8x8xf32> to vector<2x8xf32>
    %115 = vector.shape_cast %114 : vector<2x8xf32> to vector<2x8x1xf32>
    %116 = tpu.reciprocal %115 {approx = true} : vector<2x8x1xf32> -> vector<2x8x1xf32>
    %117 = vector.broadcast %116 : vector<2x8x1xf32> to vector<2x8x8xf32>
    %118 = arith.mulf %113, %117 : vector<2x8x8xf32>
    %119 = arith.truncf %118 : vector<2x8x8xf32> to vector<2x8x8xbf16>
    "tpu.trace_start"() <{level = 10 : i32, message = "bqk,bkd->bqd"}> : () -> ()
    %cst_53 = arith.constant dense<0.000000e+00> : vector<2x8x8xf32>
    %120 = tpu.matmul %119, %105, %cst_53 {dimension_numbers = #tpu.dot_dimension_numbers<[2], [1], [1], [2], [0, 0, 0, 1, 1, 2], [0], [0]>} : vector<2x8x8xbf16>, vector<2x8x8xbf16>, vector<2x8x8xf32> -> vector<2x8x8xf32>
    "tpu.trace_stop"() : () -> ()
    %121 = vector.shape_cast %120 : vector<2x8x8xf32> to vector<16x8xf32>
    %122 = arith.truncf %121 : vector<16x8xf32> to vector<16x8xbf16>
    %c0_54 = arith.constant 0 : index
    %c24_55 = arith.constant 24 : index
    %123 = vector.load %arg13[%c0_54, %c24_55] : memref<16x32xbf16, #tpu.memory_space<vmem>>, vector<16x8xbf16>
    tpu.vector_store %arg13[%c0_54, %c24_55], %122 {strides = array<i32>} : memref<16x32xbf16, #tpu.memory_space<vmem>>, vector<16x8xbf16>,
    %c0_56 = arith.constant 0 : index
    %c0_57 = arith.constant 0 : index
    %124 = vector.load %arg13[%c0_56, %c0_57] : memref<16x32xbf16, #tpu.memory_space<vmem>>, vector<16x32xbf16>
    %c0_58 = arith.constant 0 : index
    %c0_59 = arith.constant 0 : index
    %c0_60 = arith.constant 0 : index
    %125 = vector.load %arg6[%c0_58, %c0_59, %c0_60] : memref<1x32x32xbf16, #tpu.memory_space<vmem>>, vector<1x32x32xbf16>
    %126 = vector.shape_cast %125 : vector<1x32x32xbf16> to vector<32x32xbf16>
    %cst_61 = arith.constant dense<0.000000e+00> : vector<16x32xf32>
    %127 = tpu.matmul %124, %126, %cst_61 {dimension_numbers = #tpu.dot_dimension_numbers<[1], [0], [0], [1], [0, 0, 1, 1], [], []>} : vector<16x32xbf16>, vector<32x32xbf16>, vector<16x32xf32> -> vector<16x32xf32>
    %128 = vector.broadcast %8 : vector<1x32xf32> to vector<16x32xf32>
    %129 = arith.addf %127, %128 : vector<16x32xf32>
    %130 = arith.addf %4, %129 : vector<16x32xf32>
    %cst_62 = arith.constant dense<0.000000e+00> : vector<16xf32>
    %131 = vector.multi_reduction <add>, %130, %cst_62 [1] : vector<16x32xf32> to vector<16xf32>
    %132 = vector.shape_cast %131 : vector<16xf32> to vector<16x1xf32>
    %cst_63 = arith.constant 3.200000e+01 : f32
    %133 = vector.broadcast %cst_63 : f32 to vector<16x1xf32>
    %134 = arith.divf %132, %133 : vector<16x1xf32>
    %135 = vector.broadcast %134 : vector<16x1xf32> to vector<16x32xf32>
    %136 = arith.subf %130, %135 : vector<16x32xf32>
    %137 = arith.mulf %136, %136 : vector<16x32xf32>
    %cst_64 = arith.constant dense<0.000000e+00> : vector<16xf32>
    %138 = vector.multi_reduction <add>, %137, %cst_64 [1] : vector<16x32xf32> to vector<16xf32>
    %139 = vector.shape_cast %138 : vector<16xf32> to vector<16x1xf32>
    %cst_65 = arith.constant 3.200000e+01 : f32
    %140 = vector.broadcast %cst_65 : f32 to vector<16x1xf32>
    %141 = arith.divf %139, %140 : vector<16x1xf32>
    %142 = vector.broadcast %134 : vector<16x1xf32> to vector<16x32xf32>
    %143 = arith.subf %130, %142 : vector<16x32xf32>
    %cst_66 = arith.constant 9.99999974E-6 : f32
    %144 = vector.broadcast %cst_66 : f32 to vector<16x1xf32>
    %145 = arith.addf %141, %144 : vector<16x1xf32>
    %146 = math.rsqrt %145 : vector<16x1xf32>
    %147 = vector.broadcast %146 : vector<16x1xf32> to vector<16x32xf32>
    %148 = arith.mulf %143, %147 : vector<16x32xf32>
    %149 = vector.broadcast %9 : vector<1x32xf32> to vector<16x32xf32>
    %150 = arith.mulf %148, %149 : vector<16x32xf32>
    %151 = vector.broadcast %10 : vector<1x32xf32> to vector<16x32xf32>
    %152 = arith.addf %150, %151 : vector<16x32xf32>
    %153 = arith.truncf %152 : vector<16x32xf32> to vector<16x32xbf16>
    %c0_67 = arith.constant 0 : index
    %c0_68 = arith.constant 0 : index
    %c0_69 = arith.constant 0 : index
    %154 = vector.load %arg7[%c0_67, %c0_68, %c0_69] : memref<1x32x64xbf16, #tpu.memory_space<vmem>>, vector<1x32x64xbf16>
    %155 = vector.shape_cast %154 : vector<1x32x64xbf16> to vector<32x64xbf16>
    %cst_70 = arith.constant dense<0.000000e+00> : vector<16x64xf32>
    %156 = tpu.matmul %153, %155, %cst_70 {dimension_numbers = #tpu.dot_dimension_numbers<[1], [0], [0], [1], [0, 0, 1, 1], [], []>} : vector<16x32xbf16>, vector<32x64xbf16>, vector<16x64xf32> -> vector<16x64xf32>
    %c0_71 = arith.constant 0 : index
    %c0_72 = arith.constant 0 : index
    %c0_73 = arith.constant 0 : index
    %157 = vector.load %arg8[%c0_71, %c0_72, %c0_73] : memref<1x1x64xf32, #tpu.memory_space<vmem>>, vector<1x1x64xf32>
    %158 = vector.shape_cast %157 : vector<1x1x64xf32> to vector<1x64xf32>
    %159 = vector.broadcast %158 : vector<1x64xf32> to vector<16x64xf32>
    %160 = arith.addf %156, %159 : vector<16x64xf32>
    %cst_74 = arith.constant 0.000000e+00 : f32
    %161 = vector.broadcast %cst_74 : f32 to vector<16x64xf32>
    %162 = arith.maximumf %160, %161 : vector<16x64xf32>
    %163 = arith.truncf %162 : vector<16x64xf32> to vector<16x64xbf16>
    %c0_75 = arith.constant 0 : index
    %c0_76 = arith.constant 0 : index
    %c0_77 = arith.constant 0 : index
    %164 = vector.load %arg9[%c0_75, %c0_76, %c0_77] : memref<1x64x32xbf16, #tpu.memory_space<vmem>>, vector<1x64x32xbf16>
    %165 = vector.shape_cast %164 : vector<1x64x32xbf16> to vector<64x32xbf16>
    %cst_78 = arith.constant dense<0.000000e+00> : vector<16x32xf32>
    %166 = tpu.matmul %163, %165, %cst_78 {dimension_numbers = #tpu.dot_dimension_numbers<[1], [0], [0], [1], [0, 0, 1, 1], [], []>} : vector<16x64xbf16>, vector<64x32xbf16>, vector<16x32xf32> -> vector<16x32xf32>
    %167 = vector.broadcast %11 : vector<1x32xf32> to vector<16x32xf32>
    %168 = arith.addf %166, %167 : vector<16x32xf32>
    %169 = arith.addf %152, %168 : vector<16x32xf32>
    %cst_79 = arith.constant dense<0.000000e+00> : vector<16xf32>
    %170 = vector.multi_reduction <add>, %169, %cst_79 [1] : vector<16x32xf32> to vector<16xf32>
    %171 = vector.shape_cast %170 : vector<16xf32> to vector<16x1xf32>
    %cst_80 = arith.constant 3.200000e+01 : f32
    %172 = vector.broadcast %cst_80 : f32 to vector<16x1xf32>
    %173 = arith.divf %171, %172 : vector<16x1xf32>
    %174 = vector.broadcast %173 : vector<16x1xf32> to vector<16x32xf32>
    %175 = arith.subf %169, %174 : vector<16x32xf32>
    %176 = arith.mulf %175, %175 : vector<16x32xf32>
    %cst_81 = arith.constant dense<0.000000e+00> : vector<16xf32>
    %177 = vector.multi_reduction <add>, %176, %cst_81 [1] : vector<16x32xf32> to vector<16xf32>
    %178 = vector.shape_cast %177 : vector<16xf32> to vector<16x1xf32>
    %cst_82 = arith.constant 3.200000e+01 : f32
    %179 = vector.broadcast %cst_82 : f32 to vector<16x1xf32>
    %180 = arith.divf %178, %179 : vector<16x1xf32>
    %181 = vector.broadcast %173 : vector<16x1xf32> to vector<16x32xf32>
    %182 = arith.subf %169, %181 : vector<16x32xf32>
    %cst_83 = arith.constant 9.99999974E-6 : f32
    %183 = vector.broadcast %cst_83 : f32 to vector<16x1xf32>
    %184 = arith.addf %180, %183 : vector<16x1xf32>
    %185 = math.rsqrt %184 : vector<16x1xf32>
    %186 = vector.broadcast %185 : vector<16x1xf32> to vector<16x32xf32>
    %187 = arith.mulf %182, %186 : vector<16x32xf32>
    %188 = vector.broadcast %12 : vector<1x32xf32> to vector<16x32xf32>
    %189 = arith.mulf %187, %188 : vector<16x32xf32>
    %190 = vector.broadcast %13 : vector<1x32xf32> to vector<16x32xf32>
    %191 = arith.addf %189, %190 : vector<16x32xf32>
    %192 = vector.shape_cast %191 : vector<16x32xf32> to vector<2x8x32xf32>
    %c0_84 = arith.constant 0 : index
    %c0_85 = arith.constant 0 : index
    %c0_86 = arith.constant 0 : index
    %193 = vector.load %arg11[%c0_84, %c0_85, %c0_86] : memref<2x8x32xf32, #tpu.memory_space<vmem>>, vector<2x8x32xf32>
    tpu.vector_store %arg11[%c0_84, %c0_85, %c0_86], %192 {strides = array<i32>} : memref<2x8x32xf32, #tpu.memory_space<vmem>>, vector<2x8x32xf32>,
    return
  }
  func.func @transform_0(%arg0: i32, %arg1: i32) -> (i32, i32, i32) {
    %c0_i32 = arith.constant 0 : i32
    %c0_i32_0 = arith.constant 0 : i32
    %c0_i32_1 = arith.constant 0 : i32
    return %arg0, %c0_i32, %c0_i32_0 : i32, i32, i32
  }
  func.func @transform_1(%arg0: i32, %arg1: i32) -> (i32, i32, i32) {
    %c0_i32 = arith.constant 0 : i32
    %c0_i32_0 = arith.constant 0 : i32
    %c0_i32_1 = arith.constant 0 : i32
    return %arg0, %c0_i32, %c0_i32_0 : i32, i32, i32
  }
  func.func @transform_2(%arg0: i32, %arg1: i32) -> (i32, i32, i32) {
    %c0_i32 = arith.constant 0 : i32
    %c0_i32_0 = arith.constant 0 : i32
    %c0_i32_1 = arith.constant 0 : i32
    return %arg1, %c0_i32, %c0_i32_0 : i32, i32, i32
  }
  func.func @transform_3(%arg0: i32, %arg1: i32) -> (i32, i32, i32) {
    %c0_i32 = arith.constant 0 : i32
    %c0_i32_0 = arith.constant 0 : i32
    %c0_i32_1 = arith.constant 0 : i32
    return %arg1, %c0_i32, %c0_i32_0 : i32, i32, i32
  }
  func.func @transform_4(%arg0: i32, %arg1: i32) -> (i32, i32, i32) {
    %c0_i32 = arith.constant 0 : i32
    %c0_i32_0 = arith.constant 0 : i32
    %c0_i32_1 = arith.constant 0 : i32
    return %arg1, %c0_i32, %c0_i32_0 : i32, i32, i32
  }
  func.func @transform_5(%arg0: i32, %arg1: i32) -> (i32, i32, i32) {
    %c0_i32 = arith.constant 0 : i32
    %c0_i32_0 = arith.constant 0 : i32
    %c0_i32_1 = arith.constant 0 : i32
    return %arg1, %c0_i32, %c0_i32_0 : i32, i32, i32
  }
  func.func @transform_6(%arg0: i32, %arg1: i32) -> (i32, i32, i32) {
    %c0_i32 = arith.constant 0 : i32
    %c0_i32_0 = arith.constant 0 : i32
    %c0_i32_1 = arith.constant 0 : i32
    return %arg1, %c0_i32, %c0_i32_0 : i32, i32, i32
  }
  func.func @transform_7(%arg0: i32, %arg1: i32) -> (i32, i32, i32) {
    %c0_i32 = arith.constant 0 : i32
    %c0_i32_0 = arith.constant 0 : i32
    %c0_i32_1 = arith.constant 0 : i32
    return %arg1, %c0_i32, %c0_i32_0 : i32, i32, i32
  }
  func.func @transform_8(%arg0: i32, %arg1: i32) -> (i32, i32, i32) {
    %c0_i32 = arith.constant 0 : i32
    %c0_i32_0 = arith.constant 0 : i32
    %c0_i32_1 = arith.constant 0 : i32
    return %arg1, %c0_i32, %c0_i32_0 : i32, i32, i32
  }
  func.func @transform_9(%arg0: i32, %arg1: i32) -> (i32, i32, i32) {
    %c0_i32 = arith.constant 0 : i32
    %c0_i32_0 = arith.constant 0 : i32
    %c0_i32_1 = arith.constant 0 : i32
    return %arg0, %c0_i32, %c0_i32_0 : i32, i32, i32
  }
}

</mosaic_0001>

<llo_original>
// kernel: tpu_custom_call.1
$region0: #{tpu_custom_call.1}
  #allocation0 [shape = 'u32[]', space=smem, size = 0x4, offset = 0x4, fixed_abs, tag = 'smem constant byte address 0x4 - core index']
  #allocation1 [shape = 'u32[72,128]{1,0:T(1,128)}', space=vmem, size = 0x9000, scoped, tag = 'internal scratch']
  #allocation2 [shape = 'bf16[16,96]{1,0:T(8,128)(2,1)}', space=vmem, size = 0x1000, scoped, tag = 'scratch operand']
  #allocation3 [shape = 'bf16[16,32]{1,0:T(8,128)(2,1)}', space=vmem, size = 0x1000, scoped, tag = 'scratch operand']
  %s0 = inlined_call_operand.hbm [shape: f32[2,8,32], index: 0, kind: input, shape index: {}]
  %s1 = inlined_call_operand.hbm [shape: f32[2,1,8], index: 1, kind: input, shape index: {}]
  %s2 = inlined_call_operand.vmem [shape: bf16[2,32,96], index: 2, kind: input, shape index: {}]
  %s3 = inlined_call_operand.hbm [shape: f32[2,1,96], index: 3, kind: input, shape index: {}]
  %s4 = inlined_call_operand.vmem [shape: bf16[2,32,32], index: 4, kind: input, shape index: {}]
  %s5 = inlined_call_operand.vmem [shape: bf16[2,32,64], index: 5, kind: input, shape index: {}]
  %s6 = inlined_call_operand.vmem [shape: f32[2,1,64], index: 6, kind: input, shape index: {}]
  %s7 = inlined_call_operand.vmem [shape: bf16[2,64,32], index: 7, kind: input, shape index: {}]
  %s8 = inlined_call_operand.hbm [shape: f32[2,8,32], index: 8, kind: input, shape index: {}]
  %s9 = inlined_call_operand.hbm [shape: f32[2,8,32], index: 9, kind: output, shape index: {}]
  %s10 = sld [smem:[#allocation0]]
  $region89: #{tpu_custom_call.1} parent=0
    _
  %s12 = ssub.s32 1, %s10
  %s13 = scalar_select 0, %s12, %s10
  $region1: #{tpu_custom_call.1} parent=0
    #allocation4 [shape = 'u8[8192]{0}', space=vmem, size = 0x2000, scoped, tag = 'input window, operand 0, single buffered']
    #allocation5 [shape = 's32[2]{0}', space=sflag, size = 0x8, scoped, tag = 'scoped memory for tpu_custom_call.1']
    #allocation6 [shape = 's32[2]{0}', space=sflag, size = 0x8, scoped, tag = 'scoped memory for tpu_custom_call.1']
    #allocation7 [shape = 'u8[1024]{0}', space=vmem, size = 0x400, scoped, tag = 'input window, operand 1, single buffered']
    #allocation8 [shape = 's32[1]{0}', space=sflag, size = 0x4, scoped, tag = 'scoped memory for tpu_custom_call.1']
    #allocation9 [shape = 'u8[1024]{0}', space=vmem, size = 0x400, scoped, tag = 'input window, operand 3']
    #allocation10 [shape = 'u8[8192]{0}', space=vmem, size = 0x2000, scoped, tag = 'input window, operand 8']
    #allocation11 [shape = 'u8[8192]{0}', space=vmem, size = 0x2000, scoped, tag = 'output window, operand 0, single buffered']
    %14 = vsyncpa [#allocation5], 0
    %15 = vsyncpa [#allocation8], 0
    %16 = vsyncpa [#allocation6], 0
    loop: start=0, step=1, limit=4
    $region2: #{tpu_custom_call.1} parent=1 // loop_pre_header
      _
    $region3: #{tpu_custom_call.1} parent=1 // loop_header
      %s18 = sphi 0, %s22
      %p19 = scmp.ge.s32.totalorder %s18, 4
      %s25 = sphi 0, %s37
      %s26 = sphi 0, %s33
      %s27 = sphi 0, %s25
      %s28 = sphi 0, %s26
      %s29 = sphi 0, %s27
      %s30 = sphi 0, %s28
      %s40 = sphi 0, %s42
      %s43 = sphi 0, %s40
      %s44 = sphi 0, %s43
      %s60 = sphi 0, %s44
      %s66 = sphi 0, %s68
      %s69 = sphi 0, %s66
      %s70 = sphi 0, %s69
      %s86 = sphi 0, %s70
      %s92 = sphi 0, %s94
      %s95 = sphi 0, %s92
      %s96 = sphi 0, %s95
      %s112 = sphi 0, %s96
      %s118 = sphi 0, %s120
      %s121 = sphi 0, %s118
      %s122 = sphi 0, %s121
      %s138 = sphi 0, %s122
      %s144 = sphi 0, %s146
      %s147 = sphi 0, %s144
      %s148 = sphi 0, %s147
      %s164 = sphi 0, %s148
      %s170 = sphi 0, %s172
      %s173 = sphi 0, %s170
      %s174 = sphi 0, %s173
      %s190 = sphi 0, %s174
      %s196 = sphi 0, %s198
      %s199 = sphi 0, %s196
      %s200 = sphi 0, %s199
      %s216 = sphi 0, %s200
      %s222 = sphi 0, %s224
      %s225 = sphi 0, %s222
      %s226 = sphi 0, %s225
      %s242 = sphi 0, %s226
      %s248 = sphi 0, %s250
      %s251 = sphi 0, %s248
      %s252 = sphi 0, %s251
      %s268 = sphi 0, %s252
      %s274 = sphi 0, %s276
      %s277 = sphi 0, %s274
      %s278 = sphi 0, %s277
      %s294 = sphi 0, %s278
    $region4: #{tpu_custom_call.1} parent=1 // loop_header_branch
      %21 = sbr.rel (%p19) target = $region8
    $region5: #{tpu_custom_call.1} parent=1 // loop_body
      %s23 = ssub.s32 %s18, 1
      %s24 = ssub.s32 %s18, 2
      %s31 = sadd.s32 1, %s26
      %p32 = scmp.ge.s32.totalorder %s31, 2
      %s33 = scalar_select %p32, 0, %s31
      %s34 = sadd.s32 1, %s25
      %s35 = scalar_select %p32, %s34, %s25
      %p36 = scmp.ge.s32.totalorder %s35, 1
      %s37 = scalar_select %p36, 0, %s35
      %s38 = ssub.s32 %s25, %s37
      %p39 = scmp.eq.s32.totalorder %s38, 0
      %s41 = sadd.s32 %s40, 1
      %s42 = scalar_select %p39, %s40, %s41
      %p45 = pneg %p39
      %p46 = scmp.eq.s32.totalorder %s18, 1
      %p47 = por %p45, %p46
      %p48 = scmp.ne.s32.totalorder %s40, %s43
      %p49 = scmp.eq.s32.totalorder %s18, 0
      %p50 = por %p48, %p49
      %p51 = scmp.ne.s32.totalorder %s40, %s43
      %p52 = scmp.eq.s32.totalorder %s23, 1
      %p53 = por %p51, %p52
      %p54 = scmp.ne.s32.totalorder %s43, %s44
      %p55 = scmp.eq.s32.totalorder %s23, 0
      %p56 = por %p54, %p55
      %p57 = scmp.ne.s32.totalorder %s43, %s44
      %p58 = scmp.eq.s32.totalorder %s24, 1
      %p59 = por %p57, %p58
      %p61 = scmp.ne.s32.totalorder %s44, %s60
      %p62 = scmp.eq.s32.totalorder %s24, 0
      %p63 = por %p61, %p62
      %s64 = ssub.s32 %s25, %s37
      %p65 = scmp.eq.s32.totalorder %s64, 0
      %s67 = sadd.s32 %s66, 1
      %s68 = scalar_select %p65, %s66, %s67
      %p71 = pneg %p65
      %p72 = scmp.eq.s32.totalorder %s18, 1
      %p73 = por %p71, %p72
      %p74 = scmp.ne.s32.totalorder %s66, %s69
      %p75 = scmp.eq.s32.totalorder %s18, 0
      %p76 = por %p74, %p75
      %p77 = scmp.ne.s32.totalorder %s66, %s69
      %p78 = scmp.eq.s32.totalorder %s23, 1
      %p79 = por %p77, %p78
      %p80 = scmp.ne.s32.totalorder %s69, %s70
      %p81 = scmp.eq.s32.totalorder %s23, 0
      %p82 = por %p80, %p81
      %p83 = scmp.ne.s32.totalorder %s69, %s70
      %p84 = scmp.eq.s32.totalorder %s24, 1
      %p85 = por %p83, %p84
      %p87 = scmp.ne.s32.totalorder %s70, %s86
      %p88 = scmp.eq.s32.totalorder %s24, 0
      %p89 = por %p87, %p88
      %s90 = ssub.s32 %s26, %s33
      %p91 = scmp.eq.s32.totalorder %s90, 0
      %s93 = sadd.s32 %s92, 1
      %s94 = scalar_select %p91, %s92, %s93
      %p97 = pneg %p91
      %p98 = scmp.eq.s32.totalorder %s18, 1
      %p99 = por %p97, %p98
      %p100 = scmp.ne.s32.totalorder %s92, %s95
      %p101 = scmp.eq.s32.totalorder %s18, 0
      %p102 = por %p100, %p101
      %p103 = scmp.ne.s32.totalorder %s92, %s95
      %p104 = scmp.eq.s32.totalorder %s23, 1
      %p105 = por %p103, %p104
      %p106 = scmp.ne.s32.totalorder %s95, %s96
      %p107 = scmp.eq.s32.totalorder %s23, 0
      %p108 = por %p106, %p107
      %p109 = scmp.ne.s32.totalorder %s95, %s96
      %p110 = scmp.eq.s32.totalorder %s24, 1
      %p111 = por %p109, %p110
      %p113 = scmp.ne.s32.totalorder %s96, %s112
      %p114 = scmp.eq.s32.totalorder %s24, 0
      %p115 = por %p113, %p114
      %s116 = ssub.s32 %s26, %s33
      %p117 = scmp.eq.s32.totalorder %s116, 0
      %s119 = sadd.s32 %s118, 1
      %s120 = scalar_select %p117, %s118, %s119
      %p123 = pneg %p117
      %p124 = scmp.eq.s32.totalorder %s18, 1
      %p125 = por %p123, %p124
      %p126 = scmp.ne.s32.totalorder %s118, %s121
      %p127 = scmp.eq.s32.totalorder %s18, 0
      %p128 = por %p126, %p127
      %p129 = scmp.ne.s32.totalorder %s118, %s121
      %p130 = scmp.eq.s32.totalorder %s23, 1
      %p131 = por %p129, %p130
      %p132 = scmp.ne.s32.totalorder %s121, %s122
      %p133 = scmp.eq.s32.totalorder %s23, 0
      %p134 = por %p132, %p133
      %p135 = scmp.ne.s32.totalorder %s121, %s122
      %p136 = scmp.eq.s32.totalorder %s24, 1
      %p137 = por %p135, %p136
      %p139 = scmp.ne.s32.totalorder %s122, %s138
      %p140 = scmp.eq.s32.totalorder %s24, 0
      %p141 = por %p139, %p140
      %s142 = ssub.s32 %s26, %s33
      %p143 = scmp.eq.s32.totalorder %s142, 0
      %s145 = sadd.s32 %s144, 1
      %s146 = scalar_select %p143, %s144, %s145
      %p149 = pneg %p143
      %p150 = scmp.eq.s32.totalorder %s18, 1
      %p151 = por %p149, %p150
      %p152 = scmp.ne.s32.totalorder %s144, %s147
      %p153 = scmp.eq.s32.totalorder %s18, 0
      %p154 = por %p152, %p153
      %p155 = scmp.ne.s32.totalorder %s144, %s147
      %p156 = scmp.eq.s32.totalorder %s23, 1
      %p157 = por %p155, %p156
      %p158 = scmp.ne.s32.totalorder %s147, %s148
      %p159 = scmp.eq.s32.totalorder %s23, 0
      %p160 = por %p158, %p159
      %p161 = scmp.ne.s32.totalorder %s147, %s148
      %p162 = scmp.eq.s32.totalorder %s24, 1
      %p163 = por %p161, %p162
      %p165 = scmp.ne.s32.totalorder %s148, %s164
      %p166 = scmp.eq.s32.totalorder %s24, 0
      %p167 = por %p165, %p166
      %s168 = ssub.s32 %s26, %s33
      %p169 = scmp.eq.s32.totalorder %s168, 0
      %s171 = sadd.s32 %s170, 1
      %s172 = scalar_select %p169, %s170, %s171
      %p175 = pneg %p169
      %p176 = scmp.eq.s32.totalorder %s18, 1
      %p177 = por %p175, %p176
      %p178 = scmp.ne.s32.totalorder %s170, %s173
      %p179 = scmp.eq.s32.totalorder %s18, 0
      %p180 = por %p178, %p179
      %p181 = scmp.ne.s32.totalorder %s170, %s173
      %p182 = scmp.eq.s32.totalorder %s23, 1
      %p183 = por %p181, %p182
      %p184 = scmp.ne.s32.totalorder %s173, %s174
      %p185 = scmp.eq.s32.totalorder %s23, 0
      %p186 = por %p184, %p185
      %p187 = scmp.ne.s32.totalorder %s173, %s174
      %p188 = scmp.eq.s32.totalorder %s24, 1
      %p189 = por %p187, %p188
      %p191 = scmp.ne.s32.totalorder %s174, %s190
      %p192 = scmp.eq.s32.totalorder %s24, 0
      %p193 = por %p191, %p192
      %s194 = ssub.s32 %s26, %s33
      %p195 = scmp.eq.s32.totalorder %s194, 0
      %s197 = sadd.s32 %s196, 1
      %s198 = scalar_select %p195, %s196, %s197
      %p201 = pneg %p195
      %p202 = scmp.eq.s32.totalorder %s18, 1
      %p203 = por %p201, %p202
      %p204 = scmp.ne.s32.totalorder %s196, %s199
      %p205 = scmp.eq.s32.totalorder %s18, 0
      %p206 = por %p204, %p205
      %p207 = scmp.ne.s32.totalorder %s196, %s199
      %p208 = scmp.eq.s32.totalorder %s23, 1
      %p209 = por %p207, %p208
      %p210 = scmp.ne.s32.totalorder %s199, %s200
      %p211 = scmp.eq.s32.totalorder %s23, 0
      %p212 = por %p210, %p211
      %p213 = scmp.ne.s32.totalorder %s199, %s200
      %p214 = scmp.eq.s32.totalorder %s24, 1
      %p215 = por %p213, %p214
      %p217 = scmp.ne.s32.totalorder %s200, %s216
      %p218 = scmp.eq.s32.totalorder %s24, 0
      %p219 = por %p217, %p218
      %s220 = ssub.s32 %s26, %s33
      %p221 = scmp.eq.s32.totalorder %s220, 0
      %s223 = sadd.s32 %s222, 1
      %s224 = scalar_select %p221, %s222, %s223
      %p227 = pneg %p221
      %p228 = scmp.eq.s32.totalorder %s18, 1
      %p229 = por %p227, %p228
      %p230 = scmp.ne.s32.totalorder %s222, %s225
      %p231 = scmp.eq.s32.totalorder %s18, 0
      %p232 = por %p230, %p231
      %p233 = scmp.ne.s32.totalorder %s222, %s225
      %p234 = scmp.eq.s32.totalorder %s23, 1
      %p235 = por %p233, %p234
      %p236 = scmp.ne.s32.totalorder %s225, %s226
      %p237 = scmp.eq.s32.totalorder %s23, 0
      %p238 = por %p236, %p237
      %p239 = scmp.ne.s32.totalorder %s225, %s226
      %p240 = scmp.eq.s32.totalorder %s24, 1
      %p241 = por %p239, %p240
      %p243 = scmp.ne.s32.totalorder %s226, %s242
      %p244 = scmp.eq.s32.totalorder %s24, 0
      %p245 = por %p243, %p244
      %s246 = ssub.s32 %s26, %s33
      %p247 = scmp.eq.s32.totalorder %s246, 0
      %s249 = sadd.s32 %s248, 1
      %s250 = scalar_select %p247, %s248, %s249
      %p253 = pneg %p247
      %p254 = scmp.eq.s32.totalorder %s18, 1
      %p255 = por %p253, %p254
      %p256 = scmp.ne.s32.totalorder %s248, %s251
      %p257 = scmp.eq.s32.totalorder %s18, 0
      %p258 = por %p256, %p257
      %p259 = scmp.ne.s32.totalorder %s248, %s251
      %p260 = scmp.eq.s32.totalorder %s23, 1
      %p261 = por %p259, %p260
      %p262 = scmp.ne.s32.totalorder %s251, %s252
      %p263 = scmp.eq.s32.totalorder %s23, 0
      %p264 = por %p262, %p263
      %p265 = scmp.ne.s32.totalorder %s251, %s252
      %p266 = scmp.eq.s32.totalorder %s24, 1
      %p267 = por %p265, %p266
      %p269 = scmp.ne.s32.totalorder %s252, %s268
      %p270 = scmp.eq.s32.totalorder %s24, 0
      %p271 = por %p269, %p270
      %s272 = ssub.s32 %s25, %s37
      %p273 = scmp.eq.s32.totalorder %s272, 0
      %s275 = sadd.s32 %s274, 1
      %s276 = scalar_select %p273, %s274, %s275
      %p279 = pneg %p273
      %p280 = scmp.eq.s32.totalorder %s18, 1
      %p281 = por %p279, %p280
      %p282 = scmp.ne.s32.totalorder %s274, %s277
      %p283 = scmp.eq.s32.totalorder %s18, 0
      %p284 = por %p282, %p283
      %p285 = scmp.ne.s32.totalorder %s274, %s277
      %p286 = scmp.eq.s32.totalorder %s23, 1
      %p287 = por %p285, %p286
      %p288 = scmp.ne.s32.totalorder %s277, %s278
      %p289 = scmp.eq.s32.totalorder %s23, 0
      %p290 = por %p288, %p289
      %p291 = scmp.ne.s32.totalorder %s277, %s278
      %p292 = scmp.eq.s32.totalorder %s24, 1
      %p293 = por %p291, %p292
      %p295 = scmp.ne.s32.totalorder %s278, %s294
      %p296 = scmp.eq.s32.totalorder %s24, 0
      %p297 = por %p295, %p296
      %p298 = scmp.le.s32.totalorder 1, %s18
      %p299 = scmp.lt.s32.totalorder %s18, 3
      %p300 = pnand %p298, %p299
      %p301 = pneg %p300
      // Predicated region
      $region9: #{tpu_custom_call.1} parent=5 // pred_check
        _
      $region10: #{tpu_custom_call.1} parent=5 // pred_check_branch
        %303 = sbr.rel (%p300) target = $region12
      $region11: #{tpu_custom_call.1} parent=5 // pred_region
        %s304 = ssub.s32 %s18, 1
        // Predicated region
        $region13: #{tpu_custom_call.1} parent=11 // pred_check
          %p305 = pneg %p56
        $region14: #{tpu_custom_call.1} parent=11 // pred_check_branch
          %307 = sbr.rel (%p305) target = $region16
        $region15: #{tpu_custom_call.1} parent=11 // pred_region
          %s308 = smul.u32 2, %s27
          %310 = vsyncadd [#allocation5], 0
          %s311 = smul.addr %s308, 8
          %s312 = scalar_lea.hbm %s0, %s311
          %s313 = sshll.u32 %s312, 4
          %s314 = int_to_ptr.hbm [resolvable:$true] %s313
          %s315 = sshll.u32 [#allocation4], 4
          %s316 = int_to_ptr.vmem [resolvable:$true] %s315
          %321 = dma.hbm_to_vmem [thread:$0]  %s314, 256, %s316, [#allocation5], 128, 128, 8
        $region16: #{tpu_custom_call.1} parent=11 // pred_fallthru
          _
        // Predicated region
        $region17: #{tpu_custom_call.1} parent=11 // pred_check
          %p322 = pneg %p82
        $region18: #{tpu_custom_call.1} parent=11 // pred_check_branch
          %324 = sbr.rel (%p322) target = $region20
        $region19: #{tpu_custom_call.1} parent=11 // pred_region
          %s325 = smul.u32 2, %s27
          %327 = vsyncadd [#allocation8], 0
          %s328 = scalar_lea.hbm %s1, %s325
          %s329 = sshll.u32 %s328, 4
          %s330 = int_to_ptr.hbm [resolvable:$true] %s329
          %s331 = sshll.u32 [#allocation7], 4
          %s332 = int_to_ptr.vmem [resolvable:$true] %s331
          %337 = dma.hbm_to_vmem [thread:$0]  %s330, 32, %s332, [#allocation8], 16, 16, 1
        $region20: #{tpu_custom_call.1} parent=11 // pred_fallthru
          _
      $region12: #{tpu_custom_call.1} parent=5 // pred_fallthru
        _
      %p338 = scmp.lt.s32.totalorder %s18, 2
      // Predicated region
      $region21: #{tpu_custom_call.1} parent=5 // pred_check
        %p339 = pneg %p338
      $region22: #{tpu_custom_call.1} parent=5 // pred_check_branch
        %341 = sbr.rel (%p339) target = $region24
      $region23: #{tpu_custom_call.1} parent=5 // pred_region
        // Predicated region
        $region25: #{tpu_custom_call.1} parent=23 // pred_check
          %p342 = pneg %p102
        $region26: #{tpu_custom_call.1} parent=23 // pred_check_branch
          %344 = sbr.rel (%p342) target = $region28
        $region27: #{tpu_custom_call.1} parent=23 // pred_region
          %p345 = scmp.lt.s32.totalorder %s26, 1
          %s346 = scalar_select %p345, %s26, 1
          %s347 = smul.addr %s346, 4
          %s348 = smul.addr %s347, 4
          %s349 = scalar_lea.vmem %s2, %s348
        $region28: #{tpu_custom_call.1} parent=23 // pred_fallthru
          _
        // Predicated region
        $region29: #{tpu_custom_call.1} parent=23 // pred_check
          %p350 = pneg %p128
        $region30: #{tpu_custom_call.1} parent=23 // pred_check_branch
          %352 = sbr.rel (%p350) target = $region32
        $region31: #{tpu_custom_call.1} parent=23 // pred_region
          %s353 = sand.u32 %s18, 1
          %s354 = scalar_lea.sflag [#allocation5], %s353
          %s355 = sand.u32 %s118, 1
          %s356 = scalar_lea.vmem [#allocation9], %s355
          %358 = vsyncadd %s354, 0
          %s359 = scalar_lea.hbm %s3, %s26
          %s361 = sshll.u32 %s359, 4
          %s362 = int_to_ptr.hbm [resolvable:$true] %s361
          %s363 = sshll.u32 %s356, 4
          %s364 = int_to_ptr.vmem [resolvable:$true] %s363
          %366 = dma.hbm_to_vmem [thread:$0]  %s362, 16, %s364, %s354
        $region32: #{tpu_custom_call.1} parent=23 // pred_fallthru
          _
        // Predicated region
        $region33: #{tpu_custom_call.1} parent=23 // pred_check
          %p367 = pneg %p154
        $region34: #{tpu_custom_call.1} parent=23 // pred_check_branch
          %369 = sbr.rel (%p367) target = $region36
        $region35: #{tpu_custom_call.1} parent=23 // pred_region
          %p370 = scmp.lt.s32.totalorder %s26, 1
          %s371 = scalar_select %p370, %s26, 1
          %s372 = smul.addr %s371, 4
          %s373 = smul.addr %s372, 4
          %s374 = scalar_lea.vmem %s4, %s373
        $region36: #{tpu_custom_call.1} parent=23 // pred_fallthru
          _
        // Predicated region
        $region37: #{tpu_custom_call.1} parent=23 // pred_check
          %p375 = pneg %p180
        $region38: #{tpu_custom_call.1} parent=23 // pred_check_branch
          %377 = sbr.rel (%p375) target = $region40
        $region39: #{tpu_custom_call.1} parent=23 // pred_region
          %p378 = scmp.lt.s32.totalorder %s26, 1
          %s379 = scalar_select %p378, %s26, 1
          %s380 = smul.addr %s379, 4
          %s381 = smul.addr %s380, 4
          %s382 = scalar_lea.vmem %s5, %s381
        $region40: #{tpu_custom_call.1} parent=23 // pred_fallthru
          _
        // Predicated region
        $region41: #{tpu_custom_call.1} parent=23 // pred_check
          %p383 = pneg %p206
        $region42: #{tpu_custom_call.1} parent=23 // pred_check_branch
          %385 = sbr.rel (%p383) target = $region44
        $region43: #{tpu_custom_call.1} parent=23 // pred_region
          %p386 = scmp.lt.s32.totalorder %s26, 1
          %s387 = scalar_select %p386, %s26, 1
          %s388 = scalar_lea.vmem %s6, %s387
        $region44: #{tpu_custom_call.1} parent=23 // pred_fallthru
          _
        // Predicated region
        $region45: #{tpu_custom_call.1} parent=23 // pred_check
          %p389 = pneg %p232
        $region46: #{tpu_custom_call.1} parent=23 // pred_check_branch
          %391 = sbr.rel (%p389) target = $region48
        $region47: #{tpu_custom_call.1} parent=23 // pred_region
          %p392 = scmp.lt.s32.totalorder %s26, 1
          %s393 = scalar_select %p392, %s26, 1
          %s394 = smul.addr %s393, 8
          %s395 = smul.addr %s394, 4
          %s396 = scalar_lea.vmem %s7, %s395
        $region48: #{tpu_custom_call.1} parent=23 // pred_fallthru
          _
        // Predicated region
        $region49: #{tpu_custom_call.1} parent=23 // pred_check
          %p397 = pneg %p258
        $region50: #{tpu_custom_call.1} parent=23 // pred_check_branch
          %399 = sbr.rel (%p397) target = $region52
        $region51: #{tpu_custom_call.1} parent=23 // pred_region
          %s400 = sand.u32 %s18, 1
          %s401 = scalar_lea.sflag [#allocation5], %s400
          %s402 = sand.u32 %s248, 1
          %s403 = smul.addr %s402, 8
          %s404 = scalar_lea.vmem [#allocation10], %s403
          %406 = vsyncadd %s401, 0
          %s407 = smul.addr %s26, 8
          %s408 = scalar_lea.hbm %s8, %s407
          %s410 = sshll.u32 %s408, 4
          %s411 = int_to_ptr.hbm [resolvable:$true] %s410
          %s412 = sshll.u32 %s404, 4
          %s413 = int_to_ptr.vmem [resolvable:$true] %s412
          %415 = dma.hbm_to_vmem [thread:$0]  %s411, 128, %s413, %s401
        $region52: #{tpu_custom_call.1} parent=23 // pred_fallthru
          _
      $region24: #{tpu_custom_call.1} parent=5 // pred_fallthru
        _
      %p416 = scmp.le.s32.totalorder 1, %s18
      %p417 = scmp.lt.s32.totalorder %s18, 3
      %p418 = pnand %p416, %p417
      %p419 = pneg %p418
      // Predicated region
      $region53: #{tpu_custom_call.1} parent=5 // pred_check
        _
      $region54: #{tpu_custom_call.1} parent=5 // pred_check_branch
        %421 = sbr.rel (%p418) target = $region56
      $region55: #{tpu_custom_call.1} parent=5 // pred_region
        %s422 = ssub.s32 %s18, 1
        // Predicated region
        $region57: #{tpu_custom_call.1} parent=55 // pred_check
          %p423 = pneg %p56
        $region58: #{tpu_custom_call.1} parent=55 // pred_check_branch
          %425 = sbr.rel (%p423) target = $region60
        $region59: #{tpu_custom_call.1} parent=55 // pred_region
          %427 = dma.done [#allocation5], 256
        $region60: #{tpu_custom_call.1} parent=55 // pred_fallthru
          _
        // Predicated region
        $region61: #{tpu_custom_call.1} parent=55 // pred_check
          %p428 = pneg %p82
        $region62: #{tpu_custom_call.1} parent=55 // pred_check_branch
          %430 = sbr.rel (%p428) target = $region64
        $region63: #{tpu_custom_call.1} parent=55 // pred_region
          %432 = dma.done [#allocation8], 32
        $region64: #{tpu_custom_call.1} parent=55 // pred_fallthru
          _
        %s433 = sand.u32 %s23, 1
        %s434 = scalar_lea.sflag [#allocation5], %s433
        %s435 = sand.u32 %s121, 1
        %s436 = scalar_lea.vmem [#allocation9], %s435
        // Predicated region
        $region65: #{tpu_custom_call.1} parent=55 // pred_check
          %p437 = pneg %p134
        $region66: #{tpu_custom_call.1} parent=55 // pred_check_branch
          %439 = sbr.rel (%p437) target = $region68
        $region67: #{tpu_custom_call.1} parent=55 // pred_region
          %441 = dma.done %s434, 16
        $region68: #{tpu_custom_call.1} parent=55 // pred_fallthru
          _
        %s442 = sand.u32 %s23, 1
        %s443 = scalar_lea.sflag [#allocation5], %s442
        %s444 = sand.u32 %s251, 1
        %s445 = smul.addr %s444, 8
        %s446 = scalar_lea.vmem [#allocation10], %s445
        // Predicated region
        $region69: #{tpu_custom_call.1} parent=55 // pred_check
          %p447 = pneg %p264
        $region70: #{tpu_custom_call.1} parent=55 // pred_check_branch
          %449 = sbr.rel (%p447) target = $region72
        $region71: #{tpu_custom_call.1} parent=55 // pred_region
          %451 = dma.done %s443, 128
        $region72: #{tpu_custom_call.1} parent=55 // pred_fallthru
          _
        %p452 = pneg %p56
        %p453 = pneg %p53
        %p454 = pneg %p82
        %p455 = pneg %p79
        %p456 = scmp.lt.s32.totalorder %s28, 1
        %s457 = scalar_select %p456, %s28, 1
        %s458 = smul.addr %s457, 4
        %s459 = smul.addr %s458, 4
        %s460 = scalar_lea.vmem %s2, %s459
        %p461 = pneg %p108
        %p462 = pneg %p105
        %s463 = sand.u32 %s23, 1
        %s464 = scalar_lea.sflag [#allocation5], %s463
        %s465 = sand.u32 %s121, 1
        %s466 = scalar_lea.vmem [#allocation9], %s465
        %p467 = pneg %p134
        %p468 = pneg %p131
        %p469 = scmp.lt.s32.totalorder %s28, 1
        %s470 = scalar_select %p469, %s28, 1
        %s471 = smul.addr %s470, 4
        %s472 = smul.addr %s471, 4
        %s473 = scalar_lea.vmem %s4, %s472
        %p474 = pneg %p160
        %p475 = pneg %p157
        %p476 = scmp.lt.s32.totalorder %s28, 1
        %s477 = scalar_select %p476, %s28, 1
        %s478 = smul.addr %s477, 4
        %s479 = smul.addr %s478, 4
        %s480 = scalar_lea.vmem %s5, %s479
        %p481 = pneg %p186
        %p482 = pneg %p183
        %p483 = scmp.lt.s32.totalorder %s28, 1
        %s484 = scalar_select %p483, %s28, 1
        %s485 = scalar_lea.vmem %s6, %s484
        %p486 = pneg %p212
        %p487 = pneg %p209
        %p488 = scmp.lt.s32.totalorder %s28, 1
        %s489 = scalar_select %p488, %s28, 1
        %s490 = smul.addr %s489, 8
        %s491 = smul.addr %s490, 4
        %s492 = scalar_lea.vmem %s7, %s491
        %p493 = pneg %p238
        %p494 = pneg %p235
        %s495 = sand.u32 %s23, 1
        %s496 = scalar_lea.sflag [#allocation5], %s495
        %s497 = sand.u32 %s251, 1
        %s498 = smul.addr %s497, 8
        %s499 = scalar_lea.vmem [#allocation10], %s498
        %p500 = pneg %p264
        %p501 = pneg %p261
        %p502 = pneg %p290
        %p503 = pneg %p287
        %s504 = smul.u32 2, %s27
        %s505 = smul.u32 2, %s27
        %p506 = scmp.lt.s32.totalorder %s28, 1
        %s507 = scalar_select %p506, %s28, 1
        %s508 = smul.addr %s507, 4
        %s509 = smul.addr %s508, 4
        %s510 = scalar_lea.vmem %s2, %s509
        %p511 = scmp.lt.s32.totalorder %s28, 1
        %s512 = scalar_select %p511, %s28, 1
        %s513 = smul.addr %s512, 4
        %s514 = smul.addr %s513, 4
        %s515 = scalar_lea.vmem %s4, %s514
        %p516 = scmp.lt.s32.totalorder %s28, 1
        %s517 = scalar_select %p516, %s28, 1
        %s518 = smul.addr %s517, 4
        %s519 = smul.addr %s518, 4
        %s520 = scalar_lea.vmem %s5, %s519
        %p521 = scmp.lt.s32.totalorder %s28, 1
        %s522 = scalar_select %p521, %s28, 1
        %s523 = scalar_lea.vmem %s6, %s522
        %p524 = scmp.lt.s32.totalorder %s28, 1
        %s525 = scalar_select %p524, %s28, 1
        %s526 = smul.addr %s525, 8
        %s527 = smul.addr %s526, 4
        %s528 = scalar_lea.vmem %s7, %s527
        %s529 = smul.u32 2, %s27
        %p531 = scmp.eq.s32.totalorder %s28, 0
        // Predicated region
        $region73: #{tpu_custom_call.1} parent=55 // pred_check
          %p532 = pneg %p531
        $region74: #{tpu_custom_call.1} parent=55 // pred_check_branch
          %534 = sbr.rel (%p532) target = $region76
        $region75: #{tpu_custom_call.1} parent=55 // pred_region
          %v535 = vld [vmem:[#allocation4] sm:$0xff]
          %v536 = vld [vmem:[#allocation4 + $0x8] sm:$0xff]
          %vm537 = vcmask 261120
          %538 = vst.msk [vmem:[#allocation11] sm:$0xff] %vm537, %v535
          %539 = vst.msk [vmem:[#allocation11 + $0x8] sm:$0xff] %vm537, %v536
        $region76: #{tpu_custom_call.1} parent=55 // pred_fallthru
          _
        %v540 = vld [vmem:[#allocation11] sm:$0xff]
        %v541 = vld [vmem:[#allocation11 + $0x8] sm:$0xff]
        %v542 = vpack.c.bf16 %v541, %v540
        %v543 = vld [vmem:[%s446] sm:$0xff]
        %v544 = vld [vmem:[%s510] sm:$0xf]
        %v545 = vld [vmem:[%s510 + $0x4] sm:$0xf]
        %v546 = vld [vmem:[%s510 + $0x8] sm:$0xf]
        %v547 = vld [vmem:[%s510 + $0xc] sm:$0xf]
        %v548 = vld [vmem:[%s436] sm:$0x1]
        %v550 = vperm.slane %v548, 0
        %v556 = vunpack.c.l.b16 %v544
        %v557 = vunpack.c.l.b16 %v545
        %v558 = vunpack.c.l.b16 %v546
        %v559 = vunpack.c.l.b16 %v547
        %v560 = vpack.c.b16 %v557, %v556
        %v561 = vpack.c.b16 %v559, %v558
        %vm564 = vcmask 261120
        %v566 = vsel %vm564, %v542, 0
        %568 = vmatpush.bf16.msra.mxu0 0
        %569 = vmatpush.bf16.msra.mxu0 0
        %570 = vmatpush.bf16.msra.mxu0 0
        %571 = vmatpush.bf16.msra.mxu0 0
        %572 = vmatpush.bf16.msra.mxu0 0
        %573 = vmatpush.bf16.msra.mxu0 0
        %574 = vmatpush.bf16.msra.mxu0 %v561
        %575 = vmatpush.bf16.msra.mxu0 %v560
        %576 = vmatmul.bf16.gmra.mxu0 %v566
        %v577 = vpop.f32.mrf.mxu0
        %v578 = vadd.f32 %v550, %v577
        %v579 = vpop.f32.mrf.mxu0
        %v580 = vadd.f32 %v550, %v579
        %581 = vdwg.mxu0
        %v582 = vpack.c.bf16 %v578, %v578
        %v583 = vpack.c.bf16 %v580, %v580
        %vm584 = vcmask 781312
        %585 = vst.msk [vmem:[#allocation2] sm:$0xf] %vm584, %v582
        %586 = vst.msk [vmem:[#allocation2 + $0x4] sm:$0xf] %vm584, %v583
        %v587 = vld [vmem:[#allocation7] sm:$0x1]
        %v588 = vld [vmem:[#allocation7 + $0x1] sm:$0x1]
        %v589 = vsub.f32 %v587, 1.0
        %v590 = vsub.f32 %v588, 1.0
        %v591 = vmul.f32 %v589, 1e+10
        %v592 = vmul.f32 %v590, 1e+10
        %v593 = vld [vmem:[#allocation2] sm:$0xf]
        %v594 = vld [vmem:[#allocation2 + $0x4] sm:$0xf]
        %v597 = vperm.slane %v591, 0
        %v598 = vperm.slane %v592, 0
        %v602 = vunpack.c.l.b16 %v593
        %v603 = vpack.c.b16 %v602, %v602
        %604 = vrot.lane.b32.xlu0 %v603, 96
        %v605 = vpop.permute.xlu0 %604
        %vm606 = vcmask 64512
        %v608 = vsel %vm606, %v593, 0
        %v611 = vsel %vm606, %v605, 0
        %613 = vmatpush.bf16.xpose.msra.mxu0 0
        %614 = vmatpush.bf16.xpose.msra.mxu0 0
        %615 = vmatpush.bf16.xpose.msra.mxu0 0
        %616 = vmatpush.bf16.xpose.msra.mxu0 0
        %617 = vmatpush.bf16.xpose.msra.mxu0 0
        %618 = vmatpush.bf16.xpose.msra.mxu0 0
        %619 = vmatpush.bf16.xpose.msra.mxu0 0
        %620 = vmatpush.bf16.xpose.msra.mxu0 %v611
        %621 = vmatmul.bf16.gmra.mxu0 %v608
        %v622 = vpop.f32.mrf.mxu0
        %v623 = vadd.f32 %v597, %v622
        %v624 = vpop.f32.mrf.mxu0
        %625 = vdwg.mxu0
        %v627 = vunpack.c.l.b16 %v594
        %v628 = vpack.c.b16 %v627, %v627
        %629 = vrot.lane.b32.xlu0 %v628, 96
        %v630 = vpop.permute.xlu0 %629
        %v632 = vsel %vm606, %v594, 0
        %v635 = vsel %vm606, %v630, 0
        %637 = vmatpush.bf16.xpose.msra.mxu0 0
        %638 = vmatpush.bf16.xpose.msra.mxu0 0
        %639 = vmatpush.bf16.xpose.msra.mxu0 0
        %640 = vmatpush.bf16.xpose.msra.mxu0 0
        %641 = vmatpush.bf16.xpose.msra.mxu0 0
        %642 = vmatpush.bf16.xpose.msra.mxu0 0
        %643 = vmatpush.bf16.xpose.msra.mxu0 0
        %644 = vmatpush.bf16.xpose.msra.mxu0 %v635
        %645 = vmatmul.bf16.gmra.mxu0 %v632
        %v646 = vpop.f32.mrf.mxu0
        %v647 = vadd.f32 %v598, %v646
        %v648 = vpop.f32.mrf.mxu0
        %649 = vdwg.mxu0
        %v650 = vsel %vm606, %v623, -inf
        %651 = vmax.xlane.f32.xlu0 %v650
        %v652 = vpop.xlane.xlu0 %651
        %v653 = vsel %vm606, %v647, -inf
        %654 = vmax.xlane.f32.xlu0 %v653
        %v655 = vpop.xlane.xlu0 %654
        %v656 = vsub.f32 %v623, %v652
        %v657 = vsub.f32 %v647, %v655
        %v658 = vmul.f32 %v656, 1.442695
        %v659 = vpow.pop %v658
        %v660 = vmul.f32 %v657, 1.442695
        %v661 = vpow.pop %v660
        %v662 = vsel %vm606, %v659, 0.0
        %663 = vadd.xlane.f32.xlu0 %v662
        %v664 = vpop.xlane.xlu0 %663
        %v665 = vsel %vm606, %v661, 0.0
        %666 = vadd.xlane.f32.xlu0 %v665
        %v667 = vpop.xlane.xlu0 %666
        %v668 = vrcp.pop %v664
        %v669 = vrcp.pop %v667
        %v670 = vmul.f32 %v659, %v668
        %v671 = vmul.f32 %v661, %v669
        %v672 = vpack.c.bf16 %v670, %v670
        %v673 = vpack.c.bf16 %v671, %v671
        %674 = vrot.lane.b32.xlu0 %v603, 64
        %v675 = vpop.permute.xlu0 %674
        %v677 = vsel %vm606, %v672, 0
        %vm679 = vcmask 1043456
        %v681 = vsel %vm679, %v675, 0
        %683 = vmatpush.bf16.msra.mxu0 0
        %684 = vmatpush.bf16.msra.mxu0 0
        %685 = vmatpush.bf16.msra.mxu0 0
        %686 = vmatpush.bf16.msra.mxu0 0
        %687 = vmatpush.bf16.msra.mxu0 0
        %688 = vmatpush.bf16.msra.mxu0 0
        %689 = vmatpush.bf16.msra.mxu0 0
        %690 = vmatpush.bf16.msra.mxu0 %v681
        %691 = vmatmul.bf16.gmra.mxu0 %v677
        %v692 = vpop.f32.mrf.mxu0
        %v693 = vadd.f32 0.0, %v692
        %v694 = vpop.f32.mrf.mxu0
        %695 = vdwg.mxu0
        %696 = vrot.lane.b32.xlu0 %v628, 64
        %v697 = vpop.permute.xlu0 %696
        %v699 = vsel %vm606, %v673, 0
        %v702 = vsel %vm679, %v697, 0
        %704 = vmatpush.bf16.msra.mxu0 0
        %705 = vmatpush.bf16.msra.mxu0 0
        %706 = vmatpush.bf16.msra.mxu0 0
        %707 = vmatpush.bf16.msra.mxu0 0
        %708 = vmatpush.bf16.msra.mxu0 0
        %709 = vmatpush.bf16.msra.mxu0 0
        %710 = vmatpush.bf16.msra.mxu0 0
        %711 = vmatpush.bf16.msra.mxu0 %v702
        %712 = vmatmul.bf16.gmra.mxu0 %v699
        %v713 = vpop.f32.mrf.mxu0
        %v714 = vadd.f32 0.0, %v713
        %v715 = vpop.f32.mrf.mxu0
        %716 = vdwg.mxu0
        %v717 = vpack.c.bf16 %v693, %v693
        %v718 = vpack.c.bf16 %v714, %v714
        %vm719 = vcmask 60416
        %720 = vst.msk [vmem:[#allocation3] sm:$0xf] %vm719, %v717
        %721 = vst.msk [vmem:[#allocation3 + $0x4] sm:$0xf] %vm719, %v718
        %v722 = vld [vmem:[#allocation2] sm:$0xf]
        %v723 = vld [vmem:[#allocation2 + $0x4] sm:$0xf]
        %v725 = vunpack.c.l.b16 %v722
        %v726 = vpack.c.b16 %v725, %v725
        %727 = vrot.lane.b32.xlu0 %v726, 120
        %v728 = vpop.permute.xlu0 %727
        %729 = vrot.lane.b32.xlu0 %v726, 88
        %v730 = vpop.permute.xlu0 %729
        %v732 = vsel %vm606, %v728, 0
        %v735 = vsel %vm606, %v730, 0
        %737 = vmatpush.bf16.xpose.msra.mxu0 0
        %738 = vmatpush.bf16.xpose.msra.mxu0 0
        %739 = vmatpush.bf16.xpose.msra.mxu0 0
        %740 = vmatpush.bf16.xpose.msra.mxu0 0
        %741 = vmatpush.bf16.xpose.msra.mxu0 0
        %742 = vmatpush.bf16.xpose.msra.mxu0 0
        %743 = vmatpush.bf16.xpose.msra.mxu0 0
        %744 = vmatpush.bf16.xpose.msra.mxu0 %v735
        %745 = vmatmul.bf16.gmra.mxu0 %v732
        %v746 = vpop.f32.mrf.mxu0
        %v747 = vadd.f32 %v597, %v746
        %v748 = vpop.f32.mrf.mxu0
        %749 = vdwg.mxu0
        %v751 = vunpack.c.l.b16 %v723
        %v752 = vpack.c.b16 %v751, %v751
        %753 = vrot.lane.b32.xlu0 %v752, 120
        %v754 = vpop.permute.xlu0 %753
        %755 = vrot.lane.b32.xlu0 %v752, 88
        %v756 = vpop.permute.xlu0 %755
        %v758 = vsel %vm606, %v754, 0
        %v761 = vsel %vm606, %v756, 0
        %763 = vmatpush.bf16.xpose.msra.mxu0 0
        %764 = vmatpush.bf16.xpose.msra.mxu0 0
        %765 = vmatpush.bf16.xpose.msra.mxu0 0
        %766 = vmatpush.bf16.xpose.msra.mxu0 0
        %767 = vmatpush.bf16.xpose.msra.mxu0 0
        %768 = vmatpush.bf16.xpose.msra.mxu0 0
        %769 = vmatpush.bf16.xpose.msra.mxu0 0
        %770 = vmatpush.bf16.xpose.msra.mxu0 %v761
        %771 = vmatmul.bf16.gmra.mxu0 %v758
        %v772 = vpop.f32.mrf.mxu0
        %v773 = vadd.f32 %v598, %v772
        %v774 = vpop.f32.mrf.mxu0
        %775 = vdwg.mxu0
        %v776 = vsel %vm606, %v747, -inf
        %777 = vmax.xlane.f32.xlu0 %v776
        %v778 = vpop.xlane.xlu0 %777
        %v779 = vsel %vm606, %v773, -inf
        %780 = vmax.xlane.f32.xlu0 %v779
        %v781 = vpop.xlane.xlu0 %780
        %v782 = vsub.f32 %v747, %v778
        %v783 = vsub.f32 %v773, %v781
        %v784 = vmul.f32 %v782, 1.442695
        %v785 = vpow.pop %v784
        %v786 = vmul.f32 %v783, 1.442695
        %v787 = vpow.pop %v786
        %v788 = vsel %vm606, %v785, 0.0
        %789 = vadd.xlane.f32.xlu0 %v788
        %v790 = vpop.xlane.xlu0 %789
        %v791 = vsel %vm606, %v787, 0.0
        %792 = vadd.xlane.f32.xlu0 %v791
        %v793 = vpop.xlane.xlu0 %792
        %v794 = vrcp.pop %v790
        %v795 = vrcp.pop %v793
        %v796 = vmul.f32 %v785, %v794
        %v797 = vmul.f32 %v787, %v795
        %v798 = vpack.c.bf16 %v796, %v796
        %v799 = vpack.c.bf16 %v797, %v797
        %800 = vrot.lane.b32.xlu0 %v726, 56
        %v801 = vpop.permute.xlu0 %800
        %v803 = vsel %vm606, %v798, 0
        %v806 = vsel %vm679, %v801, 0
        %808 = vmatpush.bf16.msra.mxu0 0
        %809 = vmatpush.bf16.msra.mxu0 0
        %810 = vmatpush.bf16.msra.mxu0 0
        %811 = vmatpush.bf16.msra.mxu0 0
        %812 = vmatpush.bf16.msra.mxu0 0
        %813 = vmatpush.bf16.msra.mxu0 0
        %814 = vmatpush.bf16.msra.mxu0 0
        %815 = vmatpush.bf16.msra.mxu0 %v806
        %816 = vmatmul.bf16.gmra.mxu0 %v803
        %v817 = vpop.f32.mrf.mxu0
        %v818 = vadd.f32 0.0, %v817
        %v819 = vpop.f32.mrf.mxu0
        %820 = vdwg.mxu0
        %821 = vrot.lane.b32.xlu0 %v752, 56
        %v822 = vpop.permute.xlu0 %821
        %v824 = vsel %vm606, %v799, 0
        %v827 = vsel %vm679, %v822, 0
        %829 = vmatpush.bf16.msra.mxu0 0
        %830 = vmatpush.bf16.msra.mxu0 0
        %831 = vmatpush.bf16.msra.mxu0 0
        %832 = vmatpush.bf16.msra.mxu0 0
        %833 = vmatpush.bf16.msra.mxu0 0
        %834 = vmatpush.bf16.msra.mxu0 0
        %835 = vmatpush.bf16.msra.mxu0 0
        %836 = vmatpush.bf16.msra.mxu0 %v827
        %837 = vmatmul.bf16.gmra.mxu0 %v824
        %v838 = vpop.f32.mrf.mxu0
        %v839 = vadd.f32 0.0, %v838
        %v840 = vpop.f32.mrf.mxu0
        %841 = vdwg.mxu0
        %v842 = vpack.c.bf16 %v818, %v818
        %v843 = vpack.c.bf16 %v839, %v839
        %846 = vrot.lane.b32.xlu0 %v842, 8
        %v847 = vpop.permute.xlu0 %846
        %848 = vrot.lane.b32.xlu0 %v843, 8
        %v849 = vpop.permute.xlu0 %848
        %vm852 = vcmask 126016
        %853 = vst.msk [vmem:[#allocation3] sm:$0xf] %vm852, %v847
        %854 = vst.msk [vmem:[#allocation3 + $0x4] sm:$0xf] %vm852, %v849
        %v855 = vld [vmem:[#allocation2] sm:$0xf]
        %v856 = vld [vmem:[#allocation2 + $0x4] sm:$0xf]
        %v858 = vunpack.c.l.b16 %v855
        %v859 = vpack.c.b16 %v858, %v858
        %860 = vrot.lane.b32.xlu0 %v859, 112
        %v861 = vpop.permute.xlu0 %860
        %862 = vrot.lane.b32.xlu0 %v859, 80
        %v863 = vpop.permute.xlu0 %862
        %v865 = vsel %vm606, %v861, 0
        %v868 = vsel %vm606, %v863, 0
        %870 = vmatpush.bf16.xpose.msra.mxu0 0
        %871 = vmatpush.bf16.xpose.msra.mxu0 0
        %872 = vmatpush.bf16.xpose.msra.mxu0 0
        %873 = vmatpush.bf16.xpose.msra.mxu0 0
        %874 = vmatpush.bf16.xpose.msra.mxu0 0
        %875 = vmatpush.bf16.xpose.msra.mxu0 0
        %876 = vmatpush.bf16.xpose.msra.mxu0 0
        %877 = vmatpush.bf16.xpose.msra.mxu0 %v868
        %878 = vmatmul.bf16.gmra.mxu0 %v865
        %v879 = vpop.f32.mrf.mxu0
        %v880 = vadd.f32 %v597, %v879
        %v881 = vpop.f32.mrf.mxu0
        %882 = vdwg.mxu0
        %v884 = vunpack.c.l.b16 %v856
        %v885 = vpack.c.b16 %v884, %v884
        %886 = vrot.lane.b32.xlu0 %v885, 112
        %v887 = vpop.permute.xlu0 %886
        %888 = vrot.lane.b32.xlu0 %v885, 80
        %v889 = vpop.permute.xlu0 %888
        %v891 = vsel %vm606, %v887, 0
        %v894 = vsel %vm606, %v889, 0
        %896 = vmatpush.bf16.xpose.msra.mxu0 0
        %897 = vmatpush.bf16.xpose.msra.mxu0 0
        %898 = vmatpush.bf16.xpose.msra.mxu0 0
        %899 = vmatpush.bf16.xpose.msra.mxu0 0
        %900 = vmatpush.bf16.xpose.msra.mxu0 0
        %901 = vmatpush.bf16.xpose.msra.mxu0 0
        %902 = vmatpush.bf16.xpose.msra.mxu0 0
        %903 = vmatpush.bf16.xpose.msra.mxu0 %v894
        %904 = vmatmul.bf16.gmra.mxu0 %v891
        %v905 = vpop.f32.mrf.mxu0
        %v906 = vadd.f32 %v598, %v905
        %v907 = vpop.f32.mrf.mxu0
        %908 = vdwg.mxu0
        %v909 = vsel %vm606, %v880, -inf
        %910 = vmax.xlane.f32.xlu0 %v909
        %v911 = vpop.xlane.xlu0 %910
        %v912 = vsel %vm606, %v906, -inf
        %913 = vmax.xlane.f32.xlu0 %v912
        %v914 = vpop.xlane.xlu0 %913
        %v915 = vsub.f32 %v880, %v911
        %v916 = vsub.f32 %v906, %v914
        %v917 = vmul.f32 %v915, 1.442695
        %v918 = vpow.pop %v917
        %v919 = vmul.f32 %v916, 1.442695
        %v920 = vpow.pop %v919
        %v921 = vsel %vm606, %v918, 0.0
        %922 = vadd.xlane.f32.xlu0 %v921
        %v923 = vpop.xlane.xlu0 %922
        %v924 = vsel %vm606, %v920, 0.0
        %925 = vadd.xlane.f32.xlu0 %v924
        %v926 = vpop.xlane.xlu0 %925
        %v927 = vrcp.pop %v923
        %v928 = vrcp.pop %v926
        %v929 = vmul.f32 %v918, %v927
        %v930 = vmul.f32 %v920, %v928
        %v931 = vpack.c.bf16 %v929, %v929
        %v932 = vpack.c.bf16 %v930, %v930
        %933 = vrot.lane.b32.xlu0 %v859, 48
        %v934 = vpop.permute.xlu0 %933
        %v936 = vsel %vm606, %v931, 0
        %v939 = vsel %vm679, %v934, 0
        %941 = vmatpush.bf16.msra.mxu0 0
        %942 = vmatpush.bf16.msra.mxu0 0
        %943 = vmatpush.bf16.msra.mxu0 0
        %944 = vmatpush.bf16.msra.mxu0 0
        %945 = vmatpush.bf16.msra.mxu0 0
        %946 = vmatpush.bf16.msra.mxu0 0
        %947 = vmatpush.bf16.msra.mxu0 0
        %948 = vmatpush.bf16.msra.mxu0 %v939
        %949 = vmatmul.bf16.gmra.mxu0 %v936
        %v950 = vpop.f32.mrf.mxu0
        %v951 = vadd.f32 0.0, %v950
        %v952 = vpop.f32.mrf.mxu0
        %953 = vdwg.mxu0
        %954 = vrot.lane.b32.xlu0 %v885, 48
        %v955 = vpop.permute.xlu0 %954
        %v957 = vsel %vm606, %v932, 0
        %v960 = vsel %vm679, %v955, 0
        %962 = vmatpush.bf16.msra.mxu0 0
        %963 = vmatpush.bf16.msra.mxu0 0
        %964 = vmatpush.bf16.msra.mxu0 0
        %965 = vmatpush.bf16.msra.mxu0 0
        %966 = vmatpush.bf16.msra.mxu0 0
        %967 = vmatpush.bf16.msra.mxu0 0
        %968 = vmatpush.bf16.msra.mxu0 0
        %969 = vmatpush.bf16.msra.mxu0 %v960
        %970 = vmatmul.bf16.gmra.mxu0 %v957
        %v971 = vpop.f32.mrf.mxu0
        %v972 = vadd.f32 0.0, %v971
        %v973 = vpop.f32.mrf.mxu0
        %974 = vdwg.mxu0
        %v975 = vpack.c.bf16 %v951, %v951
        %v976 = vpack.c.bf16 %v972, %v972
        %979 = vrot.lane.b32.xlu0 %v975, 16
        %v980 = vpop.permute.xlu0 %979
        %981 = vrot.lane.b32.xlu0 %v976, 16
        %v982 = vpop.permute.xlu0 %981
        %vm985 = vcmask 191616
        %986 = vst.msk [vmem:[#allocation3] sm:$0xf] %vm985, %v980
        %987 = vst.msk [vmem:[#allocation3 + $0x4] sm:$0xf] %vm985, %v982
        %v988 = vld [vmem:[#allocation2] sm:$0xf]
        %v989 = vld [vmem:[#allocation2 + $0x4] sm:$0xf]
        %v991 = vunpack.c.l.b16 %v988
        %v992 = vpack.c.b16 %v991, %v991
        %993 = vrot.lane.b32.xlu0 %v992, 104
        %v994 = vpop.permute.xlu0 %993
        %995 = vrot.lane.b32.xlu0 %v992, 72
        %v996 = vpop.permute.xlu0 %995
        %v998 = vsel %vm606, %v994, 0
        %v1001 = vsel %vm606, %v996, 0
        %1003 = vmatpush.bf16.xpose.msra.mxu0 0
        %1004 = vmatpush.bf16.xpose.msra.mxu0 0
        %1005 = vmatpush.bf16.xpose.msra.mxu0 0
        %1006 = vmatpush.bf16.xpose.msra.mxu0 0
        %1007 = vmatpush.bf16.xpose.msra.mxu0 0
        %1008 = vmatpush.bf16.xpose.msra.mxu0 0
        %1009 = vmatpush.bf16.xpose.msra.mxu0 0
        %1010 = vmatpush.bf16.xpose.msra.mxu0 %v1001
        %1011 = vmatmul.bf16.gmra.mxu0 %v998
        %v1012 = vpop.f32.mrf.mxu0
        %v1013 = vadd.f32 %v597, %v1012
        %v1014 = vpop.f32.mrf.mxu0
        %1015 = vdwg.mxu0
        %v1017 = vunpack.c.l.b16 %v989
        %v1018 = vpack.c.b16 %v1017, %v1017
        %1019 = vrot.lane.b32.xlu0 %v1018, 104
        %v1020 = vpop.permute.xlu0 %1019
        %1021 = vrot.lane.b32.xlu0 %v1018, 72
        %v1022 = vpop.permute.xlu0 %1021
        %v1024 = vsel %vm606, %v1020, 0
        %v1027 = vsel %vm606, %v1022, 0
        %1029 = vmatpush.bf16.xpose.msra.mxu0 0
        %1030 = vmatpush.bf16.xpose.msra.mxu0 0
        %1031 = vmatpush.bf16.xpose.msra.mxu0 0
        %1032 = vmatpush.bf16.xpose.msra.mxu0 0
        %1033 = vmatpush.bf16.xpose.msra.mxu0 0
        %1034 = vmatpush.bf16.xpose.msra.mxu0 0
        %1035 = vmatpush.bf16.xpose.msra.mxu0 0
        %1036 = vmatpush.bf16.xpose.msra.mxu0 %v1027
        %1037 = vmatmul.bf16.gmra.mxu0 %v1024
        %v1038 = vpop.f32.mrf.mxu0
        %v1039 = vadd.f32 %v598, %v1038
        %v1040 = vpop.f32.mrf.mxu0
        %1041 = vdwg.mxu0
        %v1042 = vsel %vm606, %v1013, -inf
        %1043 = vmax.xlane.f32.xlu0 %v1042
        %v1044 = vpop.xlane.xlu0 %1043
        %v1045 = vsel %vm606, %v1039, -inf
        %1046 = vmax.xlane.f32.xlu0 %v1045
        %v1047 = vpop.xlane.xlu0 %1046
        %v1048 = vsub.f32 %v1013, %v1044
        %v1049 = vsub.f32 %v1039, %v1047
        %v1050 = vmul.f32 %v1048, 1.442695
        %v1051 = vpow.pop %v1050
        %v1052 = vmul.f32 %v1049, 1.442695
        %v1053 = vpow.pop %v1052
        %v1054 = vsel %vm606, %v1051, 0.0
        %1055 = vadd.xlane.f32.xlu0 %v1054
        %v1056 = vpop.xlane.xlu0 %1055
        %v1057 = vsel %vm606, %v1053, 0.0
        %1058 = vadd.xlane.f32.xlu0 %v1057
        %v1059 = vpop.xlane.xlu0 %1058
        %v1060 = vrcp.pop %v1056
        %v1061 = vrcp.pop %v1059
        %v1062 = vmul.f32 %v1051, %v1060
        %v1063 = vmul.f32 %v1053, %v1061
        %v1064 = vpack.c.bf16 %v1062, %v1062
        %v1065 = vpack.c.bf16 %v1063, %v1063
        %1066 = vrot.lane.b32.xlu0 %v992, 40
        %v1067 = vpop.permute.xlu0 %1066
        %v1069 = vsel %vm606, %v1064, 0
        %v1072 = vsel %vm679, %v1067, 0
        %1074 = vmatpush.bf16.msra.mxu0 0
        %1075 = vmatpush.bf16.msra.mxu0 0
        %1076 = vmatpush.bf16.msra.mxu0 0
        %1077 = vmatpush.bf16.msra.mxu0 0
        %1078 = vmatpush.bf16.msra.mxu0 0
        %1079 = vmatpush.bf16.msra.mxu0 0
        %1080 = vmatpush.bf16.msra.mxu0 0
        %1081 = vmatpush.bf16.msra.mxu0 %v1072
        %1082 = vmatmul.bf16.gmra.mxu0 %v1069
        %v1083 = vpop.f32.mrf.mxu0
        %v1084 = vadd.f32 0.0, %v1083
        %v1085 = vpop.f32.mrf.mxu0
        %1086 = vdwg.mxu0
        %1087 = vrot.lane.b32.xlu0 %v1018, 40
        %v1088 = vpop.permute.xlu0 %1087
        %v1090 = vsel %vm606, %v1065, 0
        %v1093 = vsel %vm679, %v1088, 0
        %1095 = vmatpush.bf16.msra.mxu0 0
        %1096 = vmatpush.bf16.msra.mxu0 0
        %1097 = vmatpush.bf16.msra.mxu0 0
        %1098 = vmatpush.bf16.msra.mxu0 0
        %1099 = vmatpush.bf16.msra.mxu0 0
        %1100 = vmatpush.bf16.msra.mxu0 0
        %1101 = vmatpush.bf16.msra.mxu0 0
        %1102 = vmatpush.bf16.msra.mxu0 %v1093
        %1103 = vmatmul.bf16.gmra.mxu0 %v1090
        %v1104 = vpop.f32.mrf.mxu0
        %v1105 = vadd.f32 0.0, %v1104
        %v1106 = vpop.f32.mrf.mxu0
        %1107 = vdwg.mxu0
        %v1108 = vpack.c.bf16 %v1084, %v1084
        %v1109 = vpack.c.bf16 %v1105, %v1105
        %1112 = vrot.lane.b32.xlu0 %v1108, 24
        %v1113 = vpop.permute.xlu0 %1112
        %1114 = vrot.lane.b32.xlu0 %v1109, 24
        %v1115 = vpop.permute.xlu0 %1114
        %vm1118 = vcmask 257216
        %1119 = vst.msk [vmem:[#allocation3] sm:$0xf] %vm1118, %v1113
        %1120 = vst.msk [vmem:[#allocation3 + $0x4] sm:$0xf] %vm1118, %v1115
        %v1121 = vld [vmem:[#allocation3] sm:$0xf]
        %v1122 = vld [vmem:[#allocation3 + $0x4] sm:$0xf]
        %v1123 = vld [vmem:[%s515] sm:$0xf]
        %v1124 = vld [vmem:[%s515 + $0x4] sm:$0xf]
        %v1125 = vld [vmem:[%s515 + $0x8] sm:$0xf]
        %v1126 = vld [vmem:[%s515 + $0xc] sm:$0xf]
        %v1127 = vperm.slane %v543, 0
        %v1130 = vunpack.c.l.b16 %v1121
        %v1131 = vunpack.c.l.b16 %v1122
        %v1132 = vpack.c.b16 %v1131, %v1130
        %v1137 = vunpack.c.l.b16 %v1123
        %v1138 = vunpack.c.l.b16 %v1124
        %v1139 = vunpack.c.l.b16 %v1125
        %v1140 = vunpack.c.l.b16 %v1126
        %v1141 = vpack.c.b16 %v1138, %v1137
        %v1142 = vpack.c.b16 %v1140, %v1139
        %v1146 = vsel %vm564, %v1132, 0
        %1148 = vmatpush.bf16.msra.mxu0 0
        %1149 = vmatpush.bf16.msra.mxu0 0
        %1150 = vmatpush.bf16.msra.mxu0 0
        %1151 = vmatpush.bf16.msra.mxu0 0
        %1152 = vmatpush.bf16.msra.mxu0 0
        %1153 = vmatpush.bf16.msra.mxu0 0
        %1154 = vmatpush.bf16.msra.mxu0 %v1142
        %1155 = vmatpush.bf16.msra.mxu0 %v1141
        %1156 = vmatmul.bf16.gmra.mxu0 %v1146
        %v1157 = vpop.f32.mrf.mxu0
        %v1158 = vadd.f32 %v1127, %v1157
        %v1159 = vpop.f32.mrf.mxu0
        %v1160 = vadd.f32 %v1127, %v1159
        %1161 = vdwg.mxu0
        %v1162 = vadd.f32 %v540, %v1158
        %v1163 = vadd.f32 %v541, %v1160
        %v1164 = vsel %vm564, %v1162, 0.0
        %1165 = vadd.xlane.f32.xlu0 %v1164
        %v1166 = vpop.xlane.xlu0 %1165
        %v1167 = vsel %vm564, %v1163, 0.0
        %1168 = vadd.xlane.f32.xlu0 %v1167
        %v1169 = vpop.xlane.xlu0 %1168
        %v1170 = vrcp.pop 32.0
        %v1171 = vmul.f32 32.0, %v1170
        %v1172 = vsub.f32 1.0, %v1171
        %v1173 = vmul.f32 %v1170, %v1172
        %v1174 = vadd.f32 %v1170, %v1173
        %vm1175 = vweird.f32 %v1170
        %v1176 = vsel %vm1175, %v1170, %v1174
        %v1177 = vmul.f32 %v1166, %v1176
        %v1178 = vmul.f32 %v1169, %v1176
        %v1179 = vsub.f32 %v1162, %v1177
        %v1180 = vsub.f32 %v1163, %v1178
        %v1181 = vmul.f32 %v1179, %v1179
        %v1182 = vmul.f32 %v1180, %v1180
        %v1183 = vsel %vm564, %v1181, 0.0
        %1184 = vadd.xlane.f32.xlu0 %v1183
        %v1185 = vpop.xlane.xlu0 %1184
        %v1186 = vsel %vm564, %v1182, 0.0
        %1187 = vadd.xlane.f32.xlu0 %v1186
        %v1188 = vpop.xlane.xlu0 %1187
        %v1189 = vmul.f32 %v1185, %v1176
        %v1190 = vmul.f32 %v1188, %v1176
        %v1191 = vadd.f32 %v1189, 1e-05
        %v1192 = vadd.f32 %v1190, 1e-05
        %v1193 = vrsqrt.pop %v1191
        %v1194 = vmul.f32 %v1193, %v1191
        %v1195 = vmul.f32 %v1194, %v1193
        %v1196 = vmul.f32 0.5, %v1195
        %v1197 = vsub.f32 1.5, %v1196
        %v1198 = vmul.f32 %v1193, %v1197
        %vm1199 = vweird.f32 %v1191
        %vm1200 = vweird.f32 %v1193
        %vm1201 = vmor %vm1199, %vm1200
        %v1202 = vsel %vm1201, %v1193, %v1198
        %v1203 = vrsqrt.pop %v1192
        %v1204 = vmul.f32 %v1203, %v1192
        %v1205 = vmul.f32 %v1204, %v1203
        %v1206 = vmul.f32 0.5, %v1205
        %v1207 = vsub.f32 1.5, %v1206
        %v1208 = vmul.f32 %v1203, %v1207
        %vm1209 = vweird.f32 %v1192
        %vm1210 = vweird.f32 %v1203
        %vm1211 = vmor %vm1209, %vm1210
        %v1212 = vsel %vm1211, %v1203, %v1208
        %v1213 = vmul.f32 %v1179, %v1202
        %v1214 = vmul.f32 %v1180, %v1212
        %v1215 = vperm.slane %v543, 1
        %v1216 = vmul.f32 %v1213, %v1215
        %v1217 = vmul.f32 %v1214, %v1215
        %v1218 = vperm.slane %v543, 2
        %v1219 = vadd.f32 %v1216, %v1218
        %v1220 = vadd.f32 %v1217, %v1218
        %v1221 = vpack.c.bf16 %v1220, %v1219
        %v1222 = vld [vmem:[%s520] sm:$0xf]
        %v1223 = vld [vmem:[%s520 + $0x4] sm:$0xf]
        %v1224 = vld [vmem:[%s520 + $0x8] sm:$0xf]
        %v1225 = vld [vmem:[%s520 + $0xc] sm:$0xf]
        %v1226 = vld [vmem:[%s523] sm:$0x1]
        %v1228 = vperm.slane %v1226, 0
        %v1234 = vunpack.c.l.b16 %v1222
        %v1235 = vunpack.c.l.b16 %v1223
        %v1236 = vunpack.c.l.b16 %v1224
        %v1237 = vunpack.c.l.b16 %v1225
        %v1238 = vpack.c.b16 %v1235, %v1234
        %v1239 = vpack.c.b16 %v1237, %v1236
        %v1243 = vsel %vm564, %v1221, 0
        %1245 = vmatpush.bf16.msra.mxu0 0
        %1246 = vmatpush.bf16.msra.mxu0 0
        %1247 = vmatpush.bf16.msra.mxu0 0
        %1248 = vmatpush.bf16.msra.mxu0 0
        %1249 = vmatpush.bf16.msra.mxu0 0
        %1250 = vmatpush.bf16.msra.mxu0 0
        %1251 = vmatpush.bf16.msra.mxu0 %v1239
        %1252 = vmatpush.bf16.msra.mxu0 %v1238
        %1253 = vmatmul.bf16.gmra.mxu0 %v1243
        %v1254 = vpop.f32.mrf.mxu0
        %v1255 = vadd.f32 %v1228, %v1254
        %v1256 = vpop.f32.mrf.mxu0
        %v1257 = vadd.f32 %v1228, %v1256
        %1258 = vdwg.mxu0
        %v1259 = vmax.f32 %v1255, 0.0
        %v1260 = vmax.f32 %v1257, 0.0
        %v1261 = vpack.c.bf16 %v1260, %v1259
        %v1262 = vld [vmem:[%s528] sm:$0xf]
        %v1263 = vld [vmem:[%s528 + $0x4] sm:$0xf]
        %v1264 = vld [vmem:[%s528 + $0x8] sm:$0xf]
        %v1265 = vld [vmem:[%s528 + $0xc] sm:$0xf]
        %v1266 = vld [vmem:[%s528 + $0x10] sm:$0xf]
        %v1267 = vld [vmem:[%s528 + $0x14] sm:$0xf]
        %v1268 = vld [vmem:[%s528 + $0x18] sm:$0xf]
        %v1269 = vld [vmem:[%s528 + $0x1c] sm:$0xf]
        %v1270 = vperm.slane %v543, 3
        %v1279 = vunpack.c.l.b16 %v1262
        %v1280 = vunpack.c.l.b16 %v1263
        %v1281 = vunpack.c.l.b16 %v1264
        %v1282 = vunpack.c.l.b16 %v1265
        %v1283 = vunpack.c.l.b16 %v1266
        %v1284 = vunpack.c.l.b16 %v1267
        %v1285 = vunpack.c.l.b16 %v1268
        %v1286 = vunpack.c.l.b16 %v1269
        %v1287 = vpack.c.b16 %v1280, %v1279
        %v1288 = vpack.c.b16 %v1282, %v1281
        %v1289 = vpack.c.b16 %v1284, %v1283
        %v1290 = vpack.c.b16 %v1286, %v1285
        %vm1295 = vcmask 523264
        %v1297 = vsel %vm1295, %v1261, 0
        %1299 = vmatpush.bf16.msra.mxu0 0
        %1300 = vmatpush.bf16.msra.mxu0 0
        %1301 = vmatpush.bf16.msra.mxu0 0
        %1302 = vmatpush.bf16.msra.mxu0 0
        %1303 = vmatpush.bf16.msra.mxu0 %v1290
        %1304 = vmatpush.bf16.msra.mxu0 %v1289
        %1305 = vmatpush.bf16.msra.mxu0 %v1288
        %1306 = vmatpush.bf16.msra.mxu0 %v1287
        %1307 = vmatmul.bf16.gmra.mxu0 %v1297
        %v1308 = vpop.f32.mrf.mxu0
        %v1309 = vadd.f32 %v1270, %v1308
        %v1310 = vpop.f32.mrf.mxu0
        %v1311 = vadd.f32 %v1270, %v1310
        %1312 = vdwg.mxu0
        %v1313 = vadd.f32 %v1219, %v1309
        %v1314 = vadd.f32 %v1220, %v1311
        %v1315 = vsel %vm564, %v1313, 0.0
        %1316 = vadd.xlane.f32.xlu0 %v1315
        %v1317 = vpop.xlane.xlu0 %1316
        %v1318 = vsel %vm564, %v1314, 0.0
        %1319 = vadd.xlane.f32.xlu0 %v1318
        %v1320 = vpop.xlane.xlu0 %1319
        %v1321 = vmul.f32 %v1317, %v1176
        %v1322 = vmul.f32 %v1320, %v1176
        %v1323 = vsub.f32 %v1313, %v1321
        %v1324 = vsub.f32 %v1314, %v1322
        %v1325 = vmul.f32 %v1323, %v1323
        %v1326 = vmul.f32 %v1324, %v1324
        %v1327 = vsel %vm564, %v1325, 0.0
        %1328 = vadd.xlane.f32.xlu0 %v1327
        %v1329 = vpop.xlane.xlu0 %1328
        %v1330 = vsel %vm564, %v1326, 0.0
        %1331 = vadd.xlane.f32.xlu0 %v1330
        %v1332 = vpop.xlane.xlu0 %1331
        %v1333 = vmul.f32 %v1329, %v1176
        %v1334 = vmul.f32 %v1332, %v1176
        %v1335 = vadd.f32 %v1333, 1e-05
        %v1336 = vadd.f32 %v1334, 1e-05
        %v1337 = vrsqrt.pop %v1335
        %v1338 = vmul.f32 %v1337, %v1335
        %v1339 = vmul.f32 %v1338, %v1337
        %v1340 = vmul.f32 0.5, %v1339
        %v1341 = vsub.f32 1.5, %v1340
        %v1342 = vmul.f32 %v1337, %v1341
        %vm1343 = vweird.f32 %v1335
        %vm1344 = vweird.f32 %v1337
        %vm1345 = vmor %vm1343, %vm1344
        %v1346 = vsel %vm1345, %v1337, %v1342
        %v1347 = vrsqrt.pop %v1336
        %v1348 = vmul.f32 %v1347, %v1336
        %v1349 = vmul.f32 %v1348, %v1347
        %v1350 = vmul.f32 0.5, %v1349
        %v1351 = vsub.f32 1.5, %v1350
        %v1352 = vmul.f32 %v1347, %v1351
        %vm1353 = vweird.f32 %v1336
        %vm1354 = vweird.f32 %v1347
        %vm1355 = vmor %vm1353, %vm1354
        %v1356 = vsel %vm1355, %v1347, %v1352
        %v1357 = vmul.f32 %v1323, %v1346
        %v1358 = vmul.f32 %v1324, %v1356
        %v1359 = vperm.slane %v543, 4
        %v1360 = vmul.f32 %v1357, %v1359
        %v1361 = vmul.f32 %v1358, %v1359
        %v1362 = vperm.slane %v543, 5
        %v1363 = vadd.f32 %v1360, %v1362
        %v1364 = vadd.f32 %v1361, %v1362
        %1365 = vst.msk [vmem:[#allocation11] sm:$0xff] %vm564, %v1363
        %1366 = vst.msk [vmem:[#allocation11 + $0x8] sm:$0xff] %vm564, %v1364
        // Predicated region
        $region77: #{tpu_custom_call.1} parent=55 // pred_check
          %p1367 = pneg %p287
        $region78: #{tpu_custom_call.1} parent=55 // pred_check_branch
          %1369 = sbr.rel (%p1367) target = $region80
        $region79: #{tpu_custom_call.1} parent=55 // pred_region
          %s1370 = smul.u32 2, %s27
          %1372 = vsyncadd [#allocation6], 0
          %s1373 = smul.addr %s1370, 8
          %s1374 = scalar_lea.hbm %s9, %s1373
          %s1375 = sshll.u32 [#allocation11], 4
          %s1376 = int_to_ptr.vmem [resolvable:$true] %s1375
          %s1377 = sshll.u32 %s1374, 4
          %s1378 = int_to_ptr.hbm [resolvable:$true] %s1377
          %1383 = dma.vmem_to_hbm [thread:$0]  %s1376, 256, %s1378, [#allocation6], 128, 128, 8
        $region80: #{tpu_custom_call.1} parent=55 // pred_fallthru
          _
        // Predicated region
        $region81: #{tpu_custom_call.1} parent=55 // pred_check
          %p1384 = pneg %p287
        $region82: #{tpu_custom_call.1} parent=55 // pred_check_branch
          %1386 = sbr.rel (%p1384) target = $region84
        $region83: #{tpu_custom_call.1} parent=55 // pred_region
          %1388 = dma.done [#allocation6], 256
        $region84: #{tpu_custom_call.1} parent=55 // pred_fallthru
          _
      $region56: #{tpu_custom_call.1} parent=5 // pred_fallthru
        _
      %p1389 = scmp.le.s32.totalorder 2, %s18
      // Predicated region
      $region85: #{tpu_custom_call.1} parent=5 // pred_check
        %p1390 = pneg %p1389
      $region86: #{tpu_custom_call.1} parent=5 // pred_check_branch
        %1392 = sbr.rel (%p1390) target = $region88
      $region87: #{tpu_custom_call.1} parent=5 // pred_region
        %s1393 = ssub.s32 %s18, 2
      $region88: #{tpu_custom_call.1} parent=5 // pred_fallthru
        _
    $region6: #{tpu_custom_call.1} parent=1 // loop_footer
      %s22 = sadd.s32 1, %s18
    $region7: #{tpu_custom_call.1} parent=1 // loop_footer_branch
      %17 = sbr.rel target = $region3
    $region8: #{tpu_custom_call.1} parent=1 // loop_exit
      _
    %1394 = vsyncpa [#allocation5], 1
    %s1395 = scalar_lea.sflag [#allocation5], 1
    %1396 = vsyncpa %s1395, 1
    %1397 = vsyncpa [#allocation8], 1
    %1398 = vsyncpa [#allocation6], 1
    %s1399 = scalar_lea.sflag [#allocation6], 1
    %1400 = vsyncpa %s1399, 1

</llo_original>
